<compile_context>
chip_gen: v7x
topology: tpu7x:2x2x1
jax: 0.10.0
libtpu: 0.0.40
codegen_flags: <defaults>
</compile_context>

<pallas_src>
import jax
import jax.numpy as jnp
from jax.experimental import pallas as pl
from jax.experimental.pallas import tpu as pltpu


def _round_up8(n):
    return (n + 7) // 8 * 8


# ----------------------------------------------------------------------------
# Fused kernel: all RNN layers + final Linear in a single invocation.
# Refs: x (seq*batch, in_dim), h0 (num_layers*batch, hidden),
#       w  (packed weight slab), out (seq*batch, out), hfin (num_layers*batch, hidden)
# ----------------------------------------------------------------------------
def make_fused_rnn_kernel(seq, batch, num_layers, input_size, hidden_size,
                          output_size, row_offsets):
    H = hidden_size

    def kernel(x_ref, h0_ref, w_ref, out_ref, hfin_ref):
        # -------- static (free) views into the packed weight slab ----------
        wihs, whhs, biases = [], [], []
        for l in range(num_layers):
            in_dim = input_size if l == 0 else hidden_size
            r_ih, r_hh, r_b = row_offsets["layers"][l]
            wihs.append(w_ref[r_ih:r_ih + in_dim, :H])        # (in_dim, H)
            whhs.append(w_ref[r_hh:r_hh + H, :H])             # (H, H)
            biases.append(w_ref[r_b:r_b + 1, :H])             # (1, H)
        r_vw, r_vb = row_offsets["v"]
        vw = w_ref[r_vw:r_vw + H, :output_size]               # (H, out)
        vb = w_ref[r_vb:r_vb + 1, :output_size]               # (1, out)

        # Bias broadcast hoisted once per layer (outside the recurrence).
        bias_b = [jnp.broadcast_to(biases[l], (batch, H))
                  for l in range(num_layers)]

        # Layer-0 input projection hoisted over ALL timesteps (x is an input,
        # so this introduces no false dependence); rows pre-split so the
        # sublane extracts are off the tanh chain.
        proj0 = jnp.dot(x_ref[...], wihs[0],
                        preferred_element_type=jnp.float32) + biases[0]
        proj0_rows = [proj0[t * batch:(t + 1) * batch, :] for t in range(seq)]

        # Per-layer hidden state carried purely in registers.
        h = [h0_ref[l * batch:(l + 1) * batch, :] for l in range(num_layers)]
        layer_out = [[None] * seq for _ in range(num_layers)]

        # Wavefront over anti-diagonals d = l + t: layer l at step t depends
        # only on (l, t-1) and (l-1, t), so the per-layer chains interleave.
        for d in range(seq + num_layers - 1):
            for l in range(num_layers):
                t = d - l
                if not (0 <= t < seq):
                    continue
                if l == 0:
                    inp = proj0_rows[t]                        # bias already in
                else:
                    # Tiny per-step input projection: off-critical-path filler
                    # that breaks the false whole-layer dependence.
                    inp = jnp.dot(layer_out[l - 1][t], wihs[l],
                                  preferred_element_type=jnp.float32) + bias_b[l]
                h[l] = jnp.tanh(inp + jnp.dot(h[l], whhs[l],
                                              preferred_element_type=jnp.float32))
                layer_out[l][t] = h[l]

        # Output projection (nn.Linear) fused as the epilogue: register concat
        # of the last layer's rows -> one lane-dense matmul, one dense store.
        last = jnp.concatenate(layer_out[num_layers - 1], axis=0)  # (seq*b, H)
        out_ref[...] = (jnp.dot(last, vw, preferred_element_type=jnp.float32)
                        + vb)

        # Final hidden states: single dense store (no per-layer masked rows).
        hfin_ref[...] = jnp.concatenate(h, axis=0)

    return kernel


# ----------------------------------------------------------------------------
# One-time parameter packing: transpose, fold b_ih+b_hh, pad each segment to a
# multiple of 8 rows and a common lane width -> one DMA-able slab.
# ----------------------------------------------------------------------------
def pack_params(params, input_size, hidden_size, output_size, num_layers):
    W = max(hidden_size, output_size)

    segments = []
    row_offsets = {"layers": []}
    cur = 0

    def add_segment(a):
        nonlocal cur
        off = cur
        pad_c = W - a.shape[1]
        pad_r = _round_up8(a.shape[0]) - a.shape[0]
        segments.append(jnp.pad(a.astype(jnp.float32),
                                ((0, pad_r), (0, pad_c))))
        cur += a.shape[0] + pad_r
        return off

    for l in range(num_layers):
        p = params["layers"][l]
        wih_t = jnp.asarray(p["w_ih"], jnp.float32).T          # (in_dim, H)
        whh_t = jnp.asarray(p["w_hh"], jnp.float32).T          # (H, H)
        b = (jnp.asarray(p["b_ih"], jnp.float32)
             + jnp.asarray(p["b_hh"], jnp.float32)).reshape(1, hidden_size)
        row_offsets["layers"].append(
            (add_segment(wih_t), add_segment(whh_t), add_segment(b)))

    vw_t = jnp.asarray(params["v_w"], jnp.float32).T            # (H, out)
    vb = jnp.asarray(params["v_b"], jnp.float32).reshape(1, output_size)
    row_offsets["v"] = (add_segment(vw_t), add_segment(vb))

    slab = jnp.concatenate(segments, axis=0)                    # (R, W) f32
    return {
        "slab": slab,
        "row_offsets": row_offsets,
        "dims": (input_size, hidden_size, output_size, num_layers),
    }


def my_rnn_forward(packed, x, hidden):
    """x: (seq, batch, input_size); hidden: (num_layers, batch, hidden_size)."""
    input_size, hidden_size, output_size, num_layers = packed["dims"]
    seq, batch, in_dim = x.shape

    x2d = jnp.asarray(x, jnp.float32).reshape(seq * batch, in_dim)
    h02d = jnp.asarray(hidden, jnp.float32).reshape(num_layers * batch,
                                                    hidden_size)

    vmem = pl.BlockSpec(memory_space=pltpu.MemorySpace.VMEM)
    out2d, hfin2d = pl.pallas_call(
        make_fused_rnn_kernel(seq, batch, num_layers, input_size, hidden_size,
                              output_size, packed["row_offsets"]),
        out_shape=(
            jax.ShapeDtypeStruct((seq * batch, output_size), jnp.float32),
            jax.ShapeDtypeStruct((num_layers * batch, hidden_size),
                                 jnp.float32),
        ),
        in_specs=[vmem, vmem, vmem],
        out_specs=(vmem, vmem),
    )(x2d, h02d, packed["slab"])

    out = out2d.reshape(seq, batch, output_size)
    new_hidden = hfin2d.reshape(num_layers, batch, hidden_size)
    return out, new_hidden


# ----------------------------------------------------------------------------
# Parameter init (deterministic, in-script, PyTorch-style uniform).
# ----------------------------------------------------------------------------
def init_params(key, input_size, hidden_size, output_size, num_layers):
    params = {"layers": []}
    bound = 1.0 / jnp.sqrt(hidden_size)
    for l in range(num_layers):
        in_dim = input_size if l == 0 else hidden_size
        key, k1, k2, k3, k4 = jax.random.split(key, 5)
        params["layers"].append({
            "w_ih": jax.random.uniform(k1, (hidden_size, in_dim),
                                       minval=-bound, maxval=bound),
            "w_hh": jax.random.uniform(k2, (hidden_size, hidden_size),
                                       minval=-bound, maxval=bound),
            "b_ih": jax.random.uniform(k3, (hidden_size,),
                                       minval=-bound, maxval=bound),
            "b_hh": jax.random.uniform(k4, (hidden_size,),
                                       minval=-bound, maxval=bound),
        })
    key, k5, k6 = jax.random.split(key, 3)
    params["v_w"] = jax.random.uniform(k5, (output_size, hidden_size),
                                       minval=-bound, maxval=bound)
    params["v_b"] = jax.random.uniform(k6, (output_size,),
                                       minval=-bound, maxval=bound)
    return params


# ----------------------------------------------------------------------------
# Pure-JAX reference (same math as torch nn.RNN + nn.Linear) for correctness.
# ----------------------------------------------------------------------------
def my_rnn_reference(params, x, hidden):
    seq, batch, _ = x.shape
    num_layers = hidden.shape[0]
    layer_in = x
    h_finals = []
    for l in range(num_layers):
        p = params["layers"][l]
        h = hidden[l]
        outs = []
        for t in range(seq):
            h = jnp.tanh(layer_in[t] @ p["w_ih"].T + p["b_ih"]
                         + h @ p["w_hh"].T + p["b_hh"])
            outs.append(h)
        layer_in = jnp.stack(outs, axis=0)
        h_finals.append(h)
    new_hidden = jnp.stack(h_finals, axis=0)
    out = layer_in @ params["v_w"].T + params["v_b"]
    return out, new_hidden


if __name__ == "__main__":
    input_size, hidden_size, output_size, num_layers = 16, 32, 8, 2
    seq_len, batch = 8, 1   # init_hidden() implies batch = 1

    key = jax.random.PRNGKey(0)
    kp, kx, kh = jax.random.split(key, 3)
    params = init_params(kp, input_size, hidden_size, output_size, num_layers)
    packed = pack_params(params, input_size, hidden_size, output_size,
                         num_layers)

    x = jax.random.normal(kx, (seq_len, batch, input_size), dtype=jnp.float32)
    hidden0 = jax.random.normal(kh, (num_layers, batch, hidden_size),
                                dtype=jnp.float32)

    out, new_hidden = my_rnn_forward(packed, x, hidden0)
    out = jax.block_until_ready(out)
    new_hidden = jax.block_until_ready(new_hidden)

    ref_out, ref_hidden = my_rnn_reference(params, x, hidden0)
    assert out.shape == (seq_len, batch, output_size)
    assert new_hidden.shape == (num_layers, batch, hidden_size)
    assert jnp.allclose(out, ref_out, atol=1e-5, rtol=1e-5)
    assert jnp.allclose(new_hidden, ref_hidden, atol=1e-5, rtol=1e-5)

    print("KERNEL_OK")
</pallas_src>

<mosaic_0001>
module attributes {stable_mosaic.version = 11 : i64} {
  func.func @kernel(%arg0: memref<8x16xf32, #tpu.memory_space<vmem>>, %arg1: memref<2x32xf32, #tpu.memory_space<vmem>>, %arg2: memref<168x32xf32, #tpu.memory_space<vmem>>, %arg3: memref<8x8xf32, #tpu.memory_space<vmem>>, %arg4: memref<2x32xf32, #tpu.memory_space<vmem>>) attributes {dimension_semantics = [], scalar_prefetch = 0 : i64, scratch_operands = 0 : i64, tpu.core_type = #tpu.core_type<tc>} {
    %c0 = arith.constant 0 : index
    %c0_0 = arith.constant 0 : index
    %0 = vector.load %arg2[%c0, %c0_0] : memref<168x32xf32, #tpu.memory_space<vmem>>, vector<16x32xf32>
    %c16 = arith.constant 16 : index
    %c0_1 = arith.constant 0 : index
    %1 = vector.load %arg2[%c16, %c0_1] : memref<168x32xf32, #tpu.memory_space<vmem>>, vector<32x32xf32>
    %c48 = arith.constant 48 : index
    %c0_2 = arith.constant 0 : index
    %2 = vector.load %arg2[%c48, %c0_2] : memref<168x32xf32, #tpu.memory_space<vmem>>, vector<1x32xf32>
    %c56 = arith.constant 56 : index
    %c0_3 = arith.constant 0 : index
    %3 = vector.load %arg2[%c56, %c0_3] : memref<168x32xf32, #tpu.memory_space<vmem>>, vector<32x32xf32>
    %c88 = arith.constant 88 : index
    %c0_4 = arith.constant 0 : index
    %4 = vector.load %arg2[%c88, %c0_4] : memref<168x32xf32, #tpu.memory_space<vmem>>, vector<32x32xf32>
    %c120 = arith.constant 120 : index
    %c0_5 = arith.constant 0 : index
    %5 = vector.load %arg2[%c120, %c0_5] : memref<168x32xf32, #tpu.memory_space<vmem>>, vector<1x32xf32>
    %c128 = arith.constant 128 : index
    %c0_6 = arith.constant 0 : index
    %6 = vector.load %arg2[%c128, %c0_6] : memref<168x32xf32, #tpu.memory_space<vmem>>, vector<32x8xf32>
    %c160 = arith.constant 160 : index
    %c0_7 = arith.constant 0 : index
    %7 = vector.load %arg2[%c160, %c0_7] : memref<168x32xf32, #tpu.memory_space<vmem>>, vector<1x8xf32>
    %c0_8 = arith.constant 0 : index
    %c0_9 = arith.constant 0 : index
    %8 = vector.load %arg0[%c0_8, %c0_9] : memref<8x16xf32, #tpu.memory_space<vmem>>, vector<8x16xf32>
    %cst = arith.constant dense<0.000000e+00> : vector<8x32xf32>
    %9 = tpu.matmul %8, %0, %cst {dimension_numbers = #tpu.dot_dimension_numbers<[1], [0], [0], [1], [0, 0, 1, 1], [], []>} : vector<8x16xf32>, vector<16x32xf32>, vector<8x32xf32> -> vector<8x32xf32>
    %10 = vector.broadcast %2 : vector<1x32xf32> to vector<8x32xf32>
    %11 = arith.addf %9, %10 : vector<8x32xf32>
    %12 = vector.extract_strided_slice %11 {offsets = [0, 0], sizes = [1, 32], strides = [1, 1]} : vector<8x32xf32> to vector<1x32xf32>
    %13 = vector.extract_strided_slice %11 {offsets = [1, 0], sizes = [1, 32], strides = [1, 1]} : vector<8x32xf32> to vector<1x32xf32>
    %14 = vector.extract_strided_slice %11 {offsets = [2, 0], sizes = [1, 32], strides = [1, 1]} : vector<8x32xf32> to vector<1x32xf32>
    %15 = vector.extract_strided_slice %11 {offsets = [3, 0], sizes = [1, 32], strides = [1, 1]} : vector<8x32xf32> to vector<1x32xf32>
    %16 = vector.extract_strided_slice %11 {offsets = [4, 0], sizes = [1, 32], strides = [1, 1]} : vector<8x32xf32> to vector<1x32xf32>
    %17 = vector.extract_strided_slice %11 {offsets = [5, 0], sizes = [1, 32], strides = [1, 1]} : vector<8x32xf32> to vector<1x32xf32>
    %18 = vector.extract_strided_slice %11 {offsets = [6, 0], sizes = [1, 32], strides = [1, 1]} : vector<8x32xf32> to vector<1x32xf32>
    %19 = vector.extract_strided_slice %11 {offsets = [7, 0], sizes = [1, 32], strides = [1, 1]} : vector<8x32xf32> to vector<1x32xf32>
    %c0_10 = arith.constant 0 : index
    %c0_11 = arith.constant 0 : index
    %20 = vector.load %arg1[%c0_10, %c0_11] : memref<2x32xf32, #tpu.memory_space<vmem>>, vector<1x32xf32>
    %c1 = arith.constant 1 : index
    %c0_12 = arith.constant 0 : index
    %21 = vector.load %arg1[%c1, %c0_12] : memref<2x32xf32, #tpu.memory_space<vmem>>, vector<1x32xf32>
    %cst_13 = arith.constant dense<0.000000e+00> : vector<1x32xf32>
    %22 = tpu.matmul %20, %1, %cst_13 {dimension_numbers = #tpu.dot_dimension_numbers<[1], [0], [0], [1], [0, 0, 1, 1], [], []>} : vector<1x32xf32>, vector<32x32xf32>, vector<1x32xf32> -> vector<1x32xf32>
    %23 = arith.addf %12, %22 : vector<1x32xf32>
    %24 = math.tanh %23 : vector<1x32xf32>
    %cst_14 = arith.constant dense<0.000000e+00> : vector<1x32xf32>
    %25 = tpu.matmul %24, %1, %cst_14 {dimension_numbers = #tpu.dot_dimension_numbers<[1], [0], [0], [1], [0, 0, 1, 1], [], []>} : vector<1x32xf32>, vector<32x32xf32>, vector<1x32xf32> -> vector<1x32xf32>
    %26 = arith.addf %13, %25 : vector<1x32xf32>
    %27 = math.tanh %26 : vector<1x32xf32>
    %cst_15 = arith.constant dense<0.000000e+00> : vector<1x32xf32>
    %28 = tpu.matmul %24, %3, %cst_15 {dimension_numbers = #tpu.dot_dimension_numbers<[1], [0], [0], [1], [0, 0, 1, 1], [], []>} : vector<1x32xf32>, vector<32x32xf32>, vector<1x32xf32> -> vector<1x32xf32>
    %29 = arith.addf %28, %5 : vector<1x32xf32>
    %cst_16 = arith.constant dense<0.000000e+00> : vector<1x32xf32>
    %30 = tpu.matmul %21, %4, %cst_16 {dimension_numbers = #tpu.dot_dimension_numbers<[1], [0], [0], [1], [0, 0, 1, 1], [], []>} : vector<1x32xf32>, vector<32x32xf32>, vector<1x32xf32> -> vector<1x32xf32>
    %31 = arith.addf %29, %30 : vector<1x32xf32>
    %32 = math.tanh %31 : vector<1x32xf32>
    %cst_17 = arith.constant dense<0.000000e+00> : vector<1x32xf32>
    %33 = tpu.matmul %27, %1, %cst_17 {dimension_numbers = #tpu.dot_dimension_numbers<[1], [0], [0], [1], [0, 0, 1, 1], [], []>} : vector<1x32xf32>, vector<32x32xf32>, vector<1x32xf32> -> vector<1x32xf32>
    %34 = arith.addf %14, %33 : vector<1x32xf32>
    %35 = math.tanh %34 : vector<1x32xf32>
    %cst_18 = arith.constant dense<0.000000e+00> : vector<1x32xf32>
    %36 = tpu.matmul %27, %3, %cst_18 {dimension_numbers = #tpu.dot_dimension_numbers<[1], [0], [0], [1], [0, 0, 1, 1], [], []>} : vector<1x32xf32>, vector<32x32xf32>, vector<1x32xf32> -> vector<1x32xf32>
    %37 = arith.addf %36, %5 : vector<1x32xf32>
    %cst_19 = arith.constant dense<0.000000e+00> : vector<1x32xf32>
    %38 = tpu.matmul %32, %4, %cst_19 {dimension_numbers = #tpu.dot_dimension_numbers<[1], [0], [0], [1], [0, 0, 1, 1], [], []>} : vector<1x32xf32>, vector<32x32xf32>, vector<1x32xf32> -> vector<1x32xf32>
    %39 = arith.addf %37, %38 : vector<1x32xf32>
    %40 = math.tanh %39 : vector<1x32xf32>
    %cst_20 = arith.constant dense<0.000000e+00> : vector<1x32xf32>
    %41 = tpu.matmul %35, %1, %cst_20 {dimension_numbers = #tpu.dot_dimension_numbers<[1], [0], [0], [1], [0, 0, 1, 1], [], []>} : vector<1x32xf32>, vector<32x32xf32>, vector<1x32xf32> -> vector<1x32xf32>
    %42 = arith.addf %15, %41 : vector<1x32xf32>
    %43 = math.tanh %42 : vector<1x32xf32>
    %cst_21 = arith.constant dense<0.000000e+00> : vector<1x32xf32>
    %44 = tpu.matmul %35, %3, %cst_21 {dimension_numbers = #tpu.dot_dimension_numbers<[1], [0], [0], [1], [0, 0, 1, 1], [], []>} : vector<1x32xf32>, vector<32x32xf32>, vector<1x32xf32> -> vector<1x32xf32>
    %45 = arith.addf %44, %5 : vector<1x32xf32>
    %cst_22 = arith.constant dense<0.000000e+00> : vector<1x32xf32>
    %46 = tpu.matmul %40, %4, %cst_22 {dimension_numbers = #tpu.dot_dimension_numbers<[1], [0], [0], [1], [0, 0, 1, 1], [], []>} : vector<1x32xf32>, vector<32x32xf32>, vector<1x32xf32> -> vector<1x32xf32>
    %47 = arith.addf %45, %46 : vector<1x32xf32>
    %48 = math.tanh %47 : vector<1x32xf32>
    %cst_23 = arith.constant dense<0.000000e+00> : vector<1x32xf32>
    %49 = tpu.matmul %43, %1, %cst_23 {dimension_numbers = #tpu.dot_dimension_numbers<[1], [0], [0], [1], [0, 0, 1, 1], [], []>} : vector<1x32xf32>, vector<32x32xf32>, vector<1x32xf32> -> vector<1x32xf32>
    %50 = arith.addf %16, %49 : vector<1x32xf32>
    %51 = math.tanh %50 : vector<1x32xf32>
    %cst_24 = arith.constant dense<0.000000e+00> : vector<1x32xf32>
    %52 = tpu.matmul %43, %3, %cst_24 {dimension_numbers = #tpu.dot_dimension_numbers<[1], [0], [0], [1], [0, 0, 1, 1], [], []>} : vector<1x32xf32>, vector<32x32xf32>, vector<1x32xf32> -> vector<1x32xf32>
    %53 = arith.addf %52, %5 : vector<1x32xf32>
    %cst_25 = arith.constant dense<0.000000e+00> : vector<1x32xf32>
    %54 = tpu.matmul %48, %4, %cst_25 {dimension_numbers = #tpu.dot_dimension_numbers<[1], [0], [0], [1], [0, 0, 1, 1], [], []>} : vector<1x32xf32>, vector<32x32xf32>, vector<1x32xf32> -> vector<1x32xf32>
    %55 = arith.addf %53, %54 : vector<1x32xf32>
    %56 = math.tanh %55 : vector<1x32xf32>
    %cst_26 = arith.constant dense<0.000000e+00> : vector<1x32xf32>
    %57 = tpu.matmul %51, %1, %cst_26 {dimension_numbers = #tpu.dot_dimension_numbers<[1], [0], [0], [1], [0, 0, 1, 1], [], []>} : vector<1x32xf32>, vector<32x32xf32>, vector<1x32xf32> -> vector<1x32xf32>
    %58 = arith.addf %17, %57 : vector<1x32xf32>
    %59 = math.tanh %58 : vector<1x32xf32>
    %cst_27 = arith.constant dense<0.000000e+00> : vector<1x32xf32>
    %60 = tpu.matmul %51, %3, %cst_27 {dimension_numbers = #tpu.dot_dimension_numbers<[1], [0], [0], [1], [0, 0, 1, 1], [], []>} : vector<1x32xf32>, vector<32x32xf32>, vector<1x32xf32> -> vector<1x32xf32>
    %61 = arith.addf %60, %5 : vector<1x32xf32>
    %cst_28 = arith.constant dense<0.000000e+00> : vector<1x32xf32>
    %62 = tpu.matmul %56, %4, %cst_28 {dimension_numbers = #tpu.dot_dimension_numbers<[1], [0], [0], [1], [0, 0, 1, 1], [], []>} : vector<1x32xf32>, vector<32x32xf32>, vector<1x32xf32> -> vector<1x32xf32>
    %63 = arith.addf %61, %62 : vector<1x32xf32>
    %64 = math.tanh %63 : vector<1x32xf32>
    %cst_29 = arith.constant dense<0.000000e+00> : vector<1x32xf32>
    %65 = tpu.matmul %59, %1, %cst_29 {dimension_numbers = #tpu.dot_dimension_numbers<[1], [0], [0], [1], [0, 0, 1, 1], [], []>} : vector<1x32xf32>, vector<32x32xf32>, vector<1x32xf32> -> vector<1x32xf32>
    %66 = arith.addf %18, %65 : vector<1x32xf32>
    %67 = math.tanh %66 : vector<1x32xf32>
    %cst_30 = arith.constant dense<0.000000e+00> : vector<1x32xf32>
    %68 = tpu.matmul %59, %3, %cst_30 {dimension_numbers = #tpu.dot_dimension_numbers<[1], [0], [0], [1], [0, 0, 1, 1], [], []>} : vector<1x32xf32>, vector<32x32xf32>, vector<1x32xf32> -> vector<1x32xf32>
    %69 = arith.addf %68, %5 : vector<1x32xf32>
    %cst_31 = arith.constant dense<0.000000e+00> : vector<1x32xf32>
    %70 = tpu.matmul %64, %4, %cst_31 {dimension_numbers = #tpu.dot_dimension_numbers<[1], [0], [0], [1], [0, 0, 1, 1], [], []>} : vector<1x32xf32>, vector<32x32xf32>, vector<1x32xf32> -> vector<1x32xf32>
    %71 = arith.addf %69, %70 : vector<1x32xf32>
    %72 = math.tanh %71 : vector<1x32xf32>
    %cst_32 = arith.constant dense<0.000000e+00> : vector<1x32xf32>
    %73 = tpu.matmul %67, %1, %cst_32 {dimension_numbers = #tpu.dot_dimension_numbers<[1], [0], [0], [1], [0, 0, 1, 1], [], []>} : vector<1x32xf32>, vector<32x32xf32>, vector<1x32xf32> -> vector<1x32xf32>
    %74 = arith.addf %19, %73 : vector<1x32xf32>
    %75 = math.tanh %74 : vector<1x32xf32>
    %cst_33 = arith.constant dense<0.000000e+00> : vector<1x32xf32>
    %76 = tpu.matmul %67, %3, %cst_33 {dimension_numbers = #tpu.dot_dimension_numbers<[1], [0], [0], [1], [0, 0, 1, 1], [], []>} : vector<1x32xf32>, vector<32x32xf32>, vector<1x32xf32> -> vector<1x32xf32>
    %77 = arith.addf %76, %5 : vector<1x32xf32>
    %cst_34 = arith.constant dense<0.000000e+00> : vector<1x32xf32>
    %78 = tpu.matmul %72, %4, %cst_34 {dimension_numbers = #tpu.dot_dimension_numbers<[1], [0], [0], [1], [0, 0, 1, 1], [], []>} : vector<1x32xf32>, vector<32x32xf32>, vector<1x32xf32> -> vector<1x32xf32>
    %79 = arith.addf %77, %78 : vector<1x32xf32>
    %80 = math.tanh %79 : vector<1x32xf32>
    %cst_35 = arith.constant dense<0.000000e+00> : vector<1x32xf32>
    %81 = tpu.matmul %75, %3, %cst_35 {dimension_numbers = #tpu.dot_dimension_numbers<[1], [0], [0], [1], [0, 0, 1, 1], [], []>} : vector<1x32xf32>, vector<32x32xf32>, vector<1x32xf32> -> vector<1x32xf32>
    %82 = arith.addf %81, %5 : vector<1x32xf32>
    %cst_36 = arith.constant dense<0.000000e+00> : vector<1x32xf32>
    %83 = tpu.matmul %80, %4, %cst_36 {dimension_numbers = #tpu.dot_dimension_numbers<[1], [0], [0], [1], [0, 0, 1, 1], [], []>} : vector<1x32xf32>, vector<32x32xf32>, vector<1x32xf32> -> vector<1x32xf32>
    %84 = arith.addf %82, %83 : vector<1x32xf32>
    %85 = math.tanh %84 : vector<1x32xf32>
    %86 = tpu.concatenate %32, %40, %48, %56, %64, %72, %80, %85 in 0 : vector<1x32xf32>, vector<1x32xf32>, vector<1x32xf32>, vector<1x32xf32>, vector<1x32xf32>, vector<1x32xf32>, vector<1x32xf32>, vector<1x32xf32> -> vector<8x32xf32>
    %cst_37 = arith.constant dense<0.000000e+00> : vector<8x8xf32>
    %87 = tpu.matmul %86, %6, %cst_37 {dimension_numbers = #tpu.dot_dimension_numbers<[1], [0], [0], [1], [0, 0, 1, 1], [], []>} : vector<8x32xf32>, vector<32x8xf32>, vector<8x8xf32> -> vector<8x8xf32>
    %88 = vector.broadcast %7 : vector<1x8xf32> to vector<8x8xf32>
    %89 = arith.addf %87, %88 : vector<8x8xf32>
    %c0_38 = arith.constant 0 : index
    %c0_39 = arith.constant 0 : index
    %90 = vector.load %arg3[%c0_38, %c0_39] : memref<8x8xf32, #tpu.memory_space<vmem>>, vector<8x8xf32>
    tpu.vector_store %arg3[%c0_38, %c0_39], %89 {strides = array<i32>} : memref<8x8xf32, #tpu.memory_space<vmem>>, vector<8x8xf32>,
    %91 = tpu.concatenate %75, %85 in 0 : vector<1x32xf32>, vector<1x32xf32> -> vector<2x32xf32>
    %c0_40 = arith.constant 0 : index
    %c0_41 = arith.constant 0 : index
    %92 = vector.load %arg4[%c0_40, %c0_41] : memref<2x32xf32, #tpu.memory_space<vmem>>, vector<2x32xf32>
    tpu.vector_store %arg4[%c0_40, %c0_41], %91 {strides = array<i32>} : memref<2x32xf32, #tpu.memory_space<vmem>>, vector<2x32xf32>,
    return
  }
}

</mosaic_0001>

<llo_original>
// kernel: tpu_custom_call.1
$region0: #{tpu_custom_call.1}
  #allocation0 [shape = 'u32[]', space=smem, size = 0x4, offset = 0x4, fixed_abs, tag = 'smem constant byte address 0x4 - core index']
  #allocation1 [shape = 'u32[144,128]{1,0:T(1,128)}', space=vmem, size = 0x12000, scoped, tag = 'internal scratch']
  %s0 = inlined_call_operand.vmem [shape: f32[8,16], index: 0, kind: input, shape index: {}]
  %s1 = inlined_call_operand.vmem [shape: f32[2,32], index: 1, kind: input, shape index: {}]
  %s2 = inlined_call_operand.vmem [shape: f32[168,32], index: 2, kind: input, shape index: {}]
  %s3 = inlined_call_operand.hbm [shape: f32[8,8], index: 3, kind: output, shape index: {0}]
  %s4 = inlined_call_operand.hbm [shape: f32[2,32], index: 4, kind: output, shape index: {1}]
  %5 = xla_tuple %s3, %s4
  %s6 = sld [smem:[#allocation0]]
  $region30: #{tpu_custom_call.1} parent=0
    _
  %s8 = ssub.s32 1, %s6
  %s9 = scalar_select 0, %s8, %s6
  $region1: #{tpu_custom_call.1} parent=0
    #allocation2 [shape = 'u8[4096]{0}', space=vmem, size = 0x1000, scoped, tag = 'output window, operand 0, single buffered']
    #allocation3 [shape = 's32[1]{0}', space=sflag, size = 0x4, scoped, tag = 'scoped memory for tpu_custom_call.1']
    #allocation4 [shape = 'u8[1024]{0}', space=vmem, size = 0x400, scoped, tag = 'output window, operand 1, single buffered']
    #allocation5 [shape = 's32[1]{0}', space=sflag, size = 0x4, scoped, tag = 'scoped memory for tpu_custom_call.1']
    %10 = vsyncpa [#allocation3], 0
    %11 = vsyncpa [#allocation5], 0
    // Predicated region
    $region2: #{tpu_custom_call.1} parent=1 // pred_check
      _
    $region3: #{tpu_custom_call.1} parent=1 // pred_check_branch
      %13 = sbr.rel (0) target = $region5
    $region4: #{tpu_custom_call.1} parent=1 // pred_region
      _
    $region5: #{tpu_custom_call.1} parent=1 // pred_fallthru
      _
    // Predicated region
    $region6: #{tpu_custom_call.1} parent=1 // pred_check
      _
    $region7: #{tpu_custom_call.1} parent=1 // pred_check_branch
      %15 = sbr.rel (0) target = $region9
    $region8: #{tpu_custom_call.1} parent=1 // pred_region
      _
    $region9: #{tpu_custom_call.1} parent=1 // pred_fallthru
      _
    // Predicated region
    $region10: #{tpu_custom_call.1} parent=1 // pred_check
      _
    $region11: #{tpu_custom_call.1} parent=1 // pred_check_branch
      %17 = sbr.rel (0) target = $region13
    $region12: #{tpu_custom_call.1} parent=1 // pred_region
      _
    $region13: #{tpu_custom_call.1} parent=1 // pred_fallthru
      _
    %v18 = vld [vmem:[%s2] sm:$0xff]
    %v19 = vld [vmem:[%s2 + $0x8] sm:$0xff]
    %v20 = vld [vmem:[%s2 + $0x10] sm:$0xff]
    %v21 = vld [vmem:[%s2 + $0x18] sm:$0xff]
    %v22 = vld [vmem:[%s2 + $0x20] sm:$0xff]
    %v23 = vld [vmem:[%s2 + $0x28] sm:$0xff]
    %v24 = vld [vmem:[%s2 + $0x30] sm:$0x1]
    %v25 = vld [vmem:[%s2 + $0x38] sm:$0xff]
    %v26 = vld [vmem:[%s2 + $0x40] sm:$0xff]
    %v27 = vld [vmem:[%s2 + $0x48] sm:$0xff]
    %v28 = vld [vmem:[%s2 + $0x50] sm:$0xff]
    %v29 = vld [vmem:[%s2 + $0x58] sm:$0xff]
    %v30 = vld [vmem:[%s2 + $0x60] sm:$0xff]
    %v31 = vld [vmem:[%s2 + $0x68] sm:$0xff]
    %v32 = vld [vmem:[%s2 + $0x70] sm:$0xff]
    %v33 = vld [vmem:[%s2 + $0x78] sm:$0x1]
    %v34 = vld [vmem:[%s2 + $0x80] sm:$0xff]
    %v35 = vld [vmem:[%s2 + $0x88] sm:$0xff]
    %v36 = vld [vmem:[%s2 + $0x90] sm:$0xff]
    %v37 = vld [vmem:[%s2 + $0x98] sm:$0xff]
    %v38 = vld [vmem:[%s2 + $0xa0] sm:$0x1]
    %v39 = vld [vmem:[%s0] sm:$0xff]
    %v40 = vlaneseq
    %v41 = vshrl.u32 %v40, 7
    %v42 = vsub.s32 0, %v41
    %v43 = vrot.slane %v24, %v42
    %vm44 = vcmask 130048
    %v46 = vsel %vm44, %v39, 0
    %48 = vmatprep.subr.mxu0 0.0
    %49 = vmatpush1.msra.mxu0 %v18
    %50 = vmatprep.subr.mxu0 0.0
    %51 = vmatpush1.msra.mxu0 %v19
    %52 = vmatprep.subr.mxu0 0.0
    %53 = vmatpush1.msra.mxu0 0.0
    %54 = vmatprep.subr.mxu0 0.0
    %55 = vmatpush1.msra.mxu0 0.0
    %56 = vmatprep.subr.mxu0 0.0
    %57 = vmatpush1.msra.mxu0 0.0
    %58 = vmatprep.subr.mxu0 0.0
    %59 = vmatpush1.msra.mxu0 0.0
    %60 = vmatprep.subr.mxu0 0.0
    %61 = vmatpush1.msra.mxu0 0.0
    %62 = vmatprep.subr.mxu0 0.0
    %63 = vmatpush1.msra.mxu0 0.0
    %64 = vmatprep.subr.mxu0 0.0
    %65 = vmatpush1.msra.mxu0 0.0
    %66 = vmatprep.subr.mxu0 0.0
    %67 = vmatpush1.msra.mxu0 0.0
    %68 = vmatprep.subr.mxu0 0.0
    %69 = vmatpush1.msra.mxu0 0.0
    %70 = vmatprep.subr.mxu0 0.0
    %71 = vmatpush1.msra.mxu0 0.0
    %72 = vmatprep.subr.mxu0 0.0
    %73 = vmatpush1.msra.mxu0 0.0
    %74 = vmatprep.subr.mxu0 0.0
    %75 = vmatpush1.msra.mxu0 0.0
    %76 = vmatprep.subr.mxu0 0.0
    %77 = vmatpush1.msra.mxu0 0.0
    %78 = vmatprep.subr.mxu0 0.0
    %79 = vmatpush1.msra.mxu0 0.0
    %80 = vmatprep.subr.mxu0 0.0
    %81 = vmatpush1.msra.mxu0 0.0
    %82 = vmatprep.subr.mxu0 0.0
    %83 = vmatpush1.msra.mxu0 0.0
    %84 = vmatprep.subr.mxu0 0.0
    %85 = vmatpush1.msra.mxu0 0.0
    %86 = vmatprep.subr.mxu0 0.0
    %87 = vmatpush1.msra.mxu0 0.0
    %88 = vmatprep.subr.mxu0 0.0
    %89 = vmatpush1.msra.mxu0 0.0
    %90 = vmatprep.subr.mxu0 0.0
    %91 = vmatpush1.msra.mxu0 0.0
    %92 = vmatprep.subr.mxu0 0.0
    %93 = vmatpush1.msra.mxu0 0.0
    %94 = vmatprep.subr.mxu0 0.0
    %95 = vmatpush1.msra.mxu0 0.0
    %96 = vmatprep.subr.mxu0 0.0
    %97 = vmatpush1.msra.mxu0 0.0
    %98 = vmatprep.subr.mxu0 0.0
    %99 = vmatpush1.msra.mxu0 0.0
    %100 = vmatprep.subr.mxu0 0.0
    %101 = vmatpush1.msra.mxu0 0.0
    %102 = vmatprep.subr.mxu0 0.0
    %103 = vmatpush1.msra.mxu0 0.0
    %104 = vmatprep.subr.mxu0 0.0
    %105 = vmatpush1.msra.mxu0 0.0
    %106 = vmatprep.subr.mxu0 0.0
    %107 = vmatpush1.msra.mxu0 0.0
    %108 = vmatprep.subr.mxu0 0.0
    %109 = vmatpush1.msra.mxu0 0.0
    %110 = vmatprep.subr.mxu0 0.0
    %111 = vmatpush1.msra.mxu0 0.0
    %112 = vmatprep.mubr.f32.mxu0 0.0
    %113 = vmatmul.mubr.f32.gmra.mrb[0].mxu0 %v46
    %v114 = vpop.f32.mrb[0].mxu0
    %v115 = vadd.f32 %v43, %v114
    %v116 = vpop.f32.mrb[0].mxu0
    %117 = vdwg.mxu0
    %v118 = vld [vmem:[%s1] sm:$0x1]
    %v119 = vld [vmem:[%s1 + $0x1] sm:$0x1]
    %vm120 = vcmask 261120
    %v122 = vsel %vm120, %v118, 0
    %124 = vmatprep.subr.mxu0 0.0
    %125 = vmatpush1.msra.mxu0 %v20
    %126 = vmatprep.subr.mxu0 0.0
    %127 = vmatpush1.msra.mxu0 %v21
    %128 = vmatprep.subr.mxu0 0.0
    %129 = vmatpush1.msra.mxu0 %v22
    %130 = vmatprep.subr.mxu0 0.0
    %131 = vmatpush1.msra.mxu0 %v23
    %132 = vmatprep.subr.mxu0 0.0
    %133 = vmatpush1.msra.mxu0 0.0
    %134 = vmatprep.subr.mxu0 0.0
    %135 = vmatpush1.msra.mxu0 0.0
    %136 = vmatprep.subr.mxu0 0.0
    %137 = vmatpush1.msra.mxu0 0.0
    %138 = vmatprep.subr.mxu0 0.0
    %139 = vmatpush1.msra.mxu0 0.0
    %140 = vmatprep.subr.mxu0 0.0
    %141 = vmatpush1.msra.mxu0 0.0
    %142 = vmatprep.subr.mxu0 0.0
    %143 = vmatpush1.msra.mxu0 0.0
    %144 = vmatprep.subr.mxu0 0.0
    %145 = vmatpush1.msra.mxu0 0.0
    %146 = vmatprep.subr.mxu0 0.0
    %147 = vmatpush1.msra.mxu0 0.0
    %148 = vmatprep.subr.mxu0 0.0
    %149 = vmatpush1.msra.mxu0 0.0
    %150 = vmatprep.subr.mxu0 0.0
    %151 = vmatpush1.msra.mxu0 0.0
    %152 = vmatprep.subr.mxu0 0.0
    %153 = vmatpush1.msra.mxu0 0.0
    %154 = vmatprep.subr.mxu0 0.0
    %155 = vmatpush1.msra.mxu0 0.0
    %156 = vmatprep.subr.mxu0 0.0
    %157 = vmatpush1.msra.mxu0 0.0
    %158 = vmatprep.subr.mxu0 0.0
    %159 = vmatpush1.msra.mxu0 0.0
    %160 = vmatprep.subr.mxu0 0.0
    %161 = vmatpush1.msra.mxu0 0.0
    %162 = vmatprep.subr.mxu0 0.0
    %163 = vmatpush1.msra.mxu0 0.0
    %164 = vmatprep.subr.mxu0 0.0
    %165 = vmatpush1.msra.mxu0 0.0
    %166 = vmatprep.subr.mxu0 0.0
    %167 = vmatpush1.msra.mxu0 0.0
    %168 = vmatprep.subr.mxu0 0.0
    %169 = vmatpush1.msra.mxu0 0.0
    %170 = vmatprep.subr.mxu0 0.0
    %171 = vmatpush1.msra.mxu0 0.0
    %172 = vmatprep.subr.mxu0 0.0
    %173 = vmatpush1.msra.mxu0 0.0
    %174 = vmatprep.subr.mxu0 0.0
    %175 = vmatpush1.msra.mxu0 0.0
    %176 = vmatprep.subr.mxu0 0.0
    %177 = vmatpush1.msra.mxu0 0.0
    %178 = vmatprep.subr.mxu0 0.0
    %179 = vmatpush1.msra.mxu0 0.0
    %180 = vmatprep.subr.mxu0 0.0
    %181 = vmatpush1.msra.mxu0 0.0
    %182 = vmatprep.subr.mxu0 0.0
    %183 = vmatpush1.msra.mxu0 0.0
    %184 = vmatprep.subr.mxu0 0.0
    %185 = vmatpush1.msra.mxu0 0.0
    %186 = vmatprep.subr.mxu0 0.0
    %187 = vmatpush1.msra.mxu0 0.0
    %188 = vmatprep.mubr.f32.mxu0 0.0
    %189 = vmatmul.mubr.f32.gmra.mrb[0].mxu0 %v122
    %v190 = vpop.f32.mrb[0].mxu0
    %v191 = vadd.f32 0.0, %v190
    %v192 = vpop.f32.mrb[0].mxu0
    %193 = vdwg.mxu0
    %v194 = vadd.f32 %v115, %v191
    %v195 = vtanh.pop %v194
    %v197 = vsel %vm120, %v195, 0
    %199 = vmatprep.subr.mxu0 0.0
    %200 = vmatpush1.msra.mxu0 %v20
    %201 = vmatprep.subr.mxu0 0.0
    %202 = vmatpush1.msra.mxu0 %v21
    %203 = vmatprep.subr.mxu0 0.0
    %204 = vmatpush1.msra.mxu0 %v22
    %205 = vmatprep.subr.mxu0 0.0
    %206 = vmatpush1.msra.mxu0 %v23
    %207 = vmatprep.subr.mxu0 0.0
    %208 = vmatpush1.msra.mxu0 0.0
    %209 = vmatprep.subr.mxu0 0.0
    %210 = vmatpush1.msra.mxu0 0.0
    %211 = vmatprep.subr.mxu0 0.0
    %212 = vmatpush1.msra.mxu0 0.0
    %213 = vmatprep.subr.mxu0 0.0
    %214 = vmatpush1.msra.mxu0 0.0
    %215 = vmatprep.subr.mxu0 0.0
    %216 = vmatpush1.msra.mxu0 0.0
    %217 = vmatprep.subr.mxu0 0.0
    %218 = vmatpush1.msra.mxu0 0.0
    %219 = vmatprep.subr.mxu0 0.0
    %220 = vmatpush1.msra.mxu0 0.0
    %221 = vmatprep.subr.mxu0 0.0
    %222 = vmatpush1.msra.mxu0 0.0
    %223 = vmatprep.subr.mxu0 0.0
    %224 = vmatpush1.msra.mxu0 0.0
    %225 = vmatprep.subr.mxu0 0.0
    %226 = vmatpush1.msra.mxu0 0.0
    %227 = vmatprep.subr.mxu0 0.0
    %228 = vmatpush1.msra.mxu0 0.0
    %229 = vmatprep.subr.mxu0 0.0
    %230 = vmatpush1.msra.mxu0 0.0
    %231 = vmatprep.subr.mxu0 0.0
    %232 = vmatpush1.msra.mxu0 0.0
    %233 = vmatprep.subr.mxu0 0.0
    %234 = vmatpush1.msra.mxu0 0.0
    %235 = vmatprep.subr.mxu0 0.0
    %236 = vmatpush1.msra.mxu0 0.0
    %237 = vmatprep.subr.mxu0 0.0
    %238 = vmatpush1.msra.mxu0 0.0
    %239 = vmatprep.subr.mxu0 0.0
    %240 = vmatpush1.msra.mxu0 0.0
    %241 = vmatprep.subr.mxu0 0.0
    %242 = vmatpush1.msra.mxu0 0.0
    %243 = vmatprep.subr.mxu0 0.0
    %244 = vmatpush1.msra.mxu0 0.0
    %245 = vmatprep.subr.mxu0 0.0
    %246 = vmatpush1.msra.mxu0 0.0
    %247 = vmatprep.subr.mxu0 0.0
    %248 = vmatpush1.msra.mxu0 0.0
    %249 = vmatprep.subr.mxu0 0.0
    %250 = vmatpush1.msra.mxu0 0.0
    %251 = vmatprep.subr.mxu0 0.0
    %252 = vmatpush1.msra.mxu0 0.0
    %253 = vmatprep.subr.mxu0 0.0
    %254 = vmatpush1.msra.mxu0 0.0
    %255 = vmatprep.subr.mxu0 0.0
    %256 = vmatpush1.msra.mxu0 0.0
    %257 = vmatprep.subr.mxu0 0.0
    %258 = vmatpush1.msra.mxu0 0.0
    %259 = vmatprep.subr.mxu0 0.0
    %260 = vmatpush1.msra.mxu0 0.0
    %261 = vmatprep.subr.mxu0 0.0
    %262 = vmatpush1.msra.mxu0 0.0
    %263 = vmatprep.mubr.f32.mxu0 0.0
    %264 = vmatmul.mubr.f32.gmra.mrb[0].mxu0 %v197
    %v265 = vpop.f32.mrb[0].mxu0
    %v266 = vadd.f32 0.0, %v265
    %v267 = vpop.f32.mrb[0].mxu0
    %268 = vdwg.mxu0
    %v270 = vrot.slane %v266, 7
    %v272 = vadd.f32 %v115, %v270
    %v273 = vtanh.pop %v272
    %274 = vmatprep.subr.mxu0 0.0
    %275 = vmatpush1.msra.mxu0 %v25
    %276 = vmatprep.subr.mxu0 0.0
    %277 = vmatpush1.msra.mxu0 %v26
    %278 = vmatprep.subr.mxu0 0.0
    %279 = vmatpush1.msra.mxu0 %v27
    %280 = vmatprep.subr.mxu0 0.0
    %281 = vmatpush1.msra.mxu0 %v28
    %282 = vmatprep.subr.mxu0 0.0
    %283 = vmatpush1.msra.mxu0 0.0
    %284 = vmatprep.subr.mxu0 0.0
    %285 = vmatpush1.msra.mxu0 0.0
    %286 = vmatprep.subr.mxu0 0.0
    %287 = vmatpush1.msra.mxu0 0.0
    %288 = vmatprep.subr.mxu0 0.0
    %289 = vmatpush1.msra.mxu0 0.0
    %290 = vmatprep.subr.mxu0 0.0
    %291 = vmatpush1.msra.mxu0 0.0
    %292 = vmatprep.subr.mxu0 0.0
    %293 = vmatpush1.msra.mxu0 0.0
    %294 = vmatprep.subr.mxu0 0.0
    %295 = vmatpush1.msra.mxu0 0.0
    %296 = vmatprep.subr.mxu0 0.0
    %297 = vmatpush1.msra.mxu0 0.0
    %298 = vmatprep.subr.mxu0 0.0
    %299 = vmatpush1.msra.mxu0 0.0
    %300 = vmatprep.subr.mxu0 0.0
    %301 = vmatpush1.msra.mxu0 0.0
    %302 = vmatprep.subr.mxu0 0.0
    %303 = vmatpush1.msra.mxu0 0.0
    %304 = vmatprep.subr.mxu0 0.0
    %305 = vmatpush1.msra.mxu0 0.0
    %306 = vmatprep.subr.mxu0 0.0
    %307 = vmatpush1.msra.mxu0 0.0
    %308 = vmatprep.subr.mxu0 0.0
    %309 = vmatpush1.msra.mxu0 0.0
    %310 = vmatprep.subr.mxu0 0.0
    %311 = vmatpush1.msra.mxu0 0.0
    %312 = vmatprep.subr.mxu0 0.0
    %313 = vmatpush1.msra.mxu0 0.0
    %314 = vmatprep.subr.mxu0 0.0
    %315 = vmatpush1.msra.mxu0 0.0
    %316 = vmatprep.subr.mxu0 0.0
    %317 = vmatpush1.msra.mxu0 0.0
    %318 = vmatprep.subr.mxu0 0.0
    %319 = vmatpush1.msra.mxu0 0.0
    %320 = vmatprep.subr.mxu0 0.0
    %321 = vmatpush1.msra.mxu0 0.0
    %322 = vmatprep.subr.mxu0 0.0
    %323 = vmatpush1.msra.mxu0 0.0
    %324 = vmatprep.subr.mxu0 0.0
    %325 = vmatpush1.msra.mxu0 0.0
    %326 = vmatprep.subr.mxu0 0.0
    %327 = vmatpush1.msra.mxu0 0.0
    %328 = vmatprep.subr.mxu0 0.0
    %329 = vmatpush1.msra.mxu0 0.0
    %330 = vmatprep.subr.mxu0 0.0
    %331 = vmatpush1.msra.mxu0 0.0
    %332 = vmatprep.subr.mxu0 0.0
    %333 = vmatpush1.msra.mxu0 0.0
    %334 = vmatprep.subr.mxu0 0.0
    %335 = vmatpush1.msra.mxu0 0.0
    %336 = vmatprep.subr.mxu0 0.0
    %337 = vmatpush1.msra.mxu0 0.0
    %338 = vmatprep.mubr.f32.mxu0 0.0
    %339 = vmatmul.mubr.f32.gmra.mrb[0].mxu0 %v197
    %v340 = vpop.f32.mrb[0].mxu0
    %v341 = vadd.f32 %v33, %v340
    %v342 = vpop.f32.mrb[0].mxu0
    %343 = vdwg.mxu0
    %v345 = vsel %vm120, %v119, 0
    %347 = vmatprep.subr.mxu0 0.0
    %348 = vmatpush1.msra.mxu0 %v29
    %349 = vmatprep.subr.mxu0 0.0
    %350 = vmatpush1.msra.mxu0 %v30
    %351 = vmatprep.subr.mxu0 0.0
    %352 = vmatpush1.msra.mxu0 %v31
    %353 = vmatprep.subr.mxu0 0.0
    %354 = vmatpush1.msra.mxu0 %v32
    %355 = vmatprep.subr.mxu0 0.0
    %356 = vmatpush1.msra.mxu0 0.0
    %357 = vmatprep.subr.mxu0 0.0
    %358 = vmatpush1.msra.mxu0 0.0
    %359 = vmatprep.subr.mxu0 0.0
    %360 = vmatpush1.msra.mxu0 0.0
    %361 = vmatprep.subr.mxu0 0.0
    %362 = vmatpush1.msra.mxu0 0.0
    %363 = vmatprep.subr.mxu0 0.0
    %364 = vmatpush1.msra.mxu0 0.0
    %365 = vmatprep.subr.mxu0 0.0
    %366 = vmatpush1.msra.mxu0 0.0
    %367 = vmatprep.subr.mxu0 0.0
    %368 = vmatpush1.msra.mxu0 0.0
    %369 = vmatprep.subr.mxu0 0.0
    %370 = vmatpush1.msra.mxu0 0.0
    %371 = vmatprep.subr.mxu0 0.0
    %372 = vmatpush1.msra.mxu0 0.0
    %373 = vmatprep.subr.mxu0 0.0
    %374 = vmatpush1.msra.mxu0 0.0
    %375 = vmatprep.subr.mxu0 0.0
    %376 = vmatpush1.msra.mxu0 0.0
    %377 = vmatprep.subr.mxu0 0.0
    %378 = vmatpush1.msra.mxu0 0.0
    %379 = vmatprep.subr.mxu0 0.0
    %380 = vmatpush1.msra.mxu0 0.0
    %381 = vmatprep.subr.mxu0 0.0
    %382 = vmatpush1.msra.mxu0 0.0
    %383 = vmatprep.subr.mxu0 0.0
    %384 = vmatpush1.msra.mxu0 0.0
    %385 = vmatprep.subr.mxu0 0.0
    %386 = vmatpush1.msra.mxu0 0.0
    %387 = vmatprep.subr.mxu0 0.0
    %388 = vmatpush1.msra.mxu0 0.0
    %389 = vmatprep.subr.mxu0 0.0
    %390 = vmatpush1.msra.mxu0 0.0
    %391 = vmatprep.subr.mxu0 0.0
    %392 = vmatpush1.msra.mxu0 0.0
    %393 = vmatprep.subr.mxu0 0.0
    %394 = vmatpush1.msra.mxu0 0.0
    %395 = vmatprep.subr.mxu0 0.0
    %396 = vmatpush1.msra.mxu0 0.0
    %397 = vmatprep.subr.mxu0 0.0
    %398 = vmatpush1.msra.mxu0 0.0
    %399 = vmatprep.subr.mxu0 0.0
    %400 = vmatpush1.msra.mxu0 0.0
    %401 = vmatprep.subr.mxu0 0.0
    %402 = vmatpush1.msra.mxu0 0.0
    %403 = vmatprep.subr.mxu0 0.0
    %404 = vmatpush1.msra.mxu0 0.0
    %405 = vmatprep.subr.mxu0 0.0
    %406 = vmatpush1.msra.mxu0 0.0
    %407 = vmatprep.subr.mxu0 0.0
    %408 = vmatpush1.msra.mxu0 0.0
    %409 = vmatprep.subr.mxu0 0.0
    %410 = vmatpush1.msra.mxu0 0.0
    %411 = vmatprep.mubr.f32.mxu0 0.0
    %412 = vmatmul.mubr.f32.gmra.mrb[0].mxu0 %v345
    %v413 = vpop.f32.mrb[0].mxu0
    %v414 = vadd.f32 0.0, %v413
    %v415 = vpop.f32.mrb[0].mxu0
    %416 = vdwg.mxu0
    %v417 = vadd.f32 %v341, %v414
    %v418 = vtanh.pop %v417
    %v420 = vrot.slane %v273, 1
    %v421 = vsel %vm120, %v420, 0
    %423 = vmatprep.subr.mxu0 0.0
    %424 = vmatpush1.msra.mxu0 %v20
    %425 = vmatprep.subr.mxu0 0.0
    %426 = vmatpush1.msra.mxu0 %v21
    %427 = vmatprep.subr.mxu0 0.0
    %428 = vmatpush1.msra.mxu0 %v22
    %429 = vmatprep.subr.mxu0 0.0
    %430 = vmatpush1.msra.mxu0 %v23
    %431 = vmatprep.subr.mxu0 0.0
    %432 = vmatpush1.msra.mxu0 0.0
    %433 = vmatprep.subr.mxu0 0.0
    %434 = vmatpush1.msra.mxu0 0.0
    %435 = vmatprep.subr.mxu0 0.0
    %436 = vmatpush1.msra.mxu0 0.0
    %437 = vmatprep.subr.mxu0 0.0
    %438 = vmatpush1.msra.mxu0 0.0
    %439 = vmatprep.subr.mxu0 0.0
    %440 = vmatpush1.msra.mxu0 0.0
    %441 = vmatprep.subr.mxu0 0.0
    %442 = vmatpush1.msra.mxu0 0.0
    %443 = vmatprep.subr.mxu0 0.0
    %444 = vmatpush1.msra.mxu0 0.0
    %445 = vmatprep.subr.mxu0 0.0
    %446 = vmatpush1.msra.mxu0 0.0
    %447 = vmatprep.subr.mxu0 0.0
    %448 = vmatpush1.msra.mxu0 0.0
    %449 = vmatprep.subr.mxu0 0.0
    %450 = vmatpush1.msra.mxu0 0.0
    %451 = vmatprep.subr.mxu0 0.0
    %452 = vmatpush1.msra.mxu0 0.0
    %453 = vmatprep.subr.mxu0 0.0
    %454 = vmatpush1.msra.mxu0 0.0
    %455 = vmatprep.subr.mxu0 0.0
    %456 = vmatpush1.msra.mxu0 0.0
    %457 = vmatprep.subr.mxu0 0.0
    %458 = vmatpush1.msra.mxu0 0.0
    %459 = vmatprep.subr.mxu0 0.0
    %460 = vmatpush1.msra.mxu0 0.0
    %461 = vmatprep.subr.mxu0 0.0
    %462 = vmatpush1.msra.mxu0 0.0
    %463 = vmatprep.subr.mxu0 0.0
    %464 = vmatpush1.msra.mxu0 0.0
    %465 = vmatprep.subr.mxu0 0.0
    %466 = vmatpush1.msra.mxu0 0.0
    %467 = vmatprep.subr.mxu0 0.0
    %468 = vmatpush1.msra.mxu0 0.0
    %469 = vmatprep.subr.mxu0 0.0
    %470 = vmatpush1.msra.mxu0 0.0
    %471 = vmatprep.subr.mxu0 0.0
    %472 = vmatpush1.msra.mxu0 0.0
    %473 = vmatprep.subr.mxu0 0.0
    %474 = vmatpush1.msra.mxu0 0.0
    %475 = vmatprep.subr.mxu0 0.0
    %476 = vmatpush1.msra.mxu0 0.0
    %477 = vmatprep.subr.mxu0 0.0
    %478 = vmatpush1.msra.mxu0 0.0
    %479 = vmatprep.subr.mxu0 0.0
    %480 = vmatpush1.msra.mxu0 0.0
    %481 = vmatprep.subr.mxu0 0.0
    %482 = vmatpush1.msra.mxu0 0.0
    %483 = vmatprep.subr.mxu0 0.0
    %484 = vmatpush1.msra.mxu0 0.0
    %485 = vmatprep.subr.mxu0 0.0
    %486 = vmatpush1.msra.mxu0 0.0
    %487 = vmatprep.mubr.f32.mxu0 0.0
    %488 = vmatmul.mubr.f32.gmra.mrb[0].mxu0 %v421
    %v489 = vpop.f32.mrb[0].mxu0
    %v490 = vadd.f32 0.0, %v489
    %v491 = vpop.f32.mrb[0].mxu0
    %492 = vdwg.mxu0
    %v494 = vrot.slane %v490, 6
    %v496 = vadd.f32 %v115, %v494
    %v497 = vtanh.pop %v496
    %498 = vmatprep.subr.mxu0 0.0
    %499 = vmatpush1.msra.mxu0 %v25
    %500 = vmatprep.subr.mxu0 0.0
    %501 = vmatpush1.msra.mxu0 %v26
    %502 = vmatprep.subr.mxu0 0.0
    %503 = vmatpush1.msra.mxu0 %v27
    %504 = vmatprep.subr.mxu0 0.0
    %505 = vmatpush1.msra.mxu0 %v28
    %506 = vmatprep.subr.mxu0 0.0
    %507 = vmatpush1.msra.mxu0 0.0
    %508 = vmatprep.subr.mxu0 0.0
    %509 = vmatpush1.msra.mxu0 0.0
    %510 = vmatprep.subr.mxu0 0.0
    %511 = vmatpush1.msra.mxu0 0.0
    %512 = vmatprep.subr.mxu0 0.0
    %513 = vmatpush1.msra.mxu0 0.0
    %514 = vmatprep.subr.mxu0 0.0
    %515 = vmatpush1.msra.mxu0 0.0
    %516 = vmatprep.subr.mxu0 0.0
    %517 = vmatpush1.msra.mxu0 0.0
    %518 = vmatprep.subr.mxu0 0.0
    %519 = vmatpush1.msra.mxu0 0.0
    %520 = vmatprep.subr.mxu0 0.0
    %521 = vmatpush1.msra.mxu0 0.0
    %522 = vmatprep.subr.mxu0 0.0
    %523 = vmatpush1.msra.mxu0 0.0
    %524 = vmatprep.subr.mxu0 0.0
    %525 = vmatpush1.msra.mxu0 0.0
    %526 = vmatprep.subr.mxu0 0.0
    %527 = vmatpush1.msra.mxu0 0.0
    %528 = vmatprep.subr.mxu0 0.0
    %529 = vmatpush1.msra.mxu0 0.0
    %530 = vmatprep.subr.mxu0 0.0
    %531 = vmatpush1.msra.mxu0 0.0
    %532 = vmatprep.subr.mxu0 0.0
    %533 = vmatpush1.msra.mxu0 0.0
    %534 = vmatprep.subr.mxu0 0.0
    %535 = vmatpush1.msra.mxu0 0.0
    %536 = vmatprep.subr.mxu0 0.0
    %537 = vmatpush1.msra.mxu0 0.0
    %538 = vmatprep.subr.mxu0 0.0
    %539 = vmatpush1.msra.mxu0 0.0
    %540 = vmatprep.subr.mxu0 0.0
    %541 = vmatpush1.msra.mxu0 0.0
    %542 = vmatprep.subr.mxu0 0.0
    %543 = vmatpush1.msra.mxu0 0.0
    %544 = vmatprep.subr.mxu0 0.0
    %545 = vmatpush1.msra.mxu0 0.0
    %546 = vmatprep.subr.mxu0 0.0
    %547 = vmatpush1.msra.mxu0 0.0
    %548 = vmatprep.subr.mxu0 0.0
    %549 = vmatpush1.msra.mxu0 0.0
    %550 = vmatprep.subr.mxu0 0.0
    %551 = vmatpush1.msra.mxu0 0.0
    %552 = vmatprep.subr.mxu0 0.0
    %553 = vmatpush1.msra.mxu0 0.0
    %554 = vmatprep.subr.mxu0 0.0
    %555 = vmatpush1.msra.mxu0 0.0
    %556 = vmatprep.subr.mxu0 0.0
    %557 = vmatpush1.msra.mxu0 0.0
    %558 = vmatprep.subr.mxu0 0.0
    %559 = vmatpush1.msra.mxu0 0.0
    %560 = vmatprep.subr.mxu0 0.0
    %561 = vmatpush1.msra.mxu0 0.0
    %562 = vmatprep.mubr.f32.mxu0 0.0
    %563 = vmatmul.mubr.f32.gmra.mrb[0].mxu0 %v421
    %v564 = vpop.f32.mrb[0].mxu0
    %v565 = vadd.f32 %v33, %v564
    %v566 = vpop.f32.mrb[0].mxu0
    %567 = vdwg.mxu0
    %v569 = vsel %vm120, %v418, 0
    %571 = vmatprep.subr.mxu0 0.0
    %572 = vmatpush1.msra.mxu0 %v29
    %573 = vmatprep.subr.mxu0 0.0
    %574 = vmatpush1.msra.mxu0 %v30
    %575 = vmatprep.subr.mxu0 0.0
    %576 = vmatpush1.msra.mxu0 %v31
    %577 = vmatprep.subr.mxu0 0.0
    %578 = vmatpush1.msra.mxu0 %v32
    %579 = vmatprep.subr.mxu0 0.0
    %580 = vmatpush1.msra.mxu0 0.0
    %581 = vmatprep.subr.mxu0 0.0
    %582 = vmatpush1.msra.mxu0 0.0
    %583 = vmatprep.subr.mxu0 0.0
    %584 = vmatpush1.msra.mxu0 0.0
    %585 = vmatprep.subr.mxu0 0.0
    %586 = vmatpush1.msra.mxu0 0.0
    %587 = vmatprep.subr.mxu0 0.0
    %588 = vmatpush1.msra.mxu0 0.0
    %589 = vmatprep.subr.mxu0 0.0
    %590 = vmatpush1.msra.mxu0 0.0
    %591 = vmatprep.subr.mxu0 0.0
    %592 = vmatpush1.msra.mxu0 0.0
    %593 = vmatprep.subr.mxu0 0.0
    %594 = vmatpush1.msra.mxu0 0.0
    %595 = vmatprep.subr.mxu0 0.0
    %596 = vmatpush1.msra.mxu0 0.0
    %597 = vmatprep.subr.mxu0 0.0
    %598 = vmatpush1.msra.mxu0 0.0
    %599 = vmatprep.subr.mxu0 0.0
    %600 = vmatpush1.msra.mxu0 0.0
    %601 = vmatprep.subr.mxu0 0.0
    %602 = vmatpush1.msra.mxu0 0.0
    %603 = vmatprep.subr.mxu0 0.0
    %604 = vmatpush1.msra.mxu0 0.0
    %605 = vmatprep.subr.mxu0 0.0
    %606 = vmatpush1.msra.mxu0 0.0
    %607 = vmatprep.subr.mxu0 0.0
    %608 = vmatpush1.msra.mxu0 0.0
    %609 = vmatprep.subr.mxu0 0.0
    %610 = vmatpush1.msra.mxu0 0.0
    %611 = vmatprep.subr.mxu0 0.0
    %612 = vmatpush1.msra.mxu0 0.0
    %613 = vmatprep.subr.mxu0 0.0
    %614 = vmatpush1.msra.mxu0 0.0
    %615 = vmatprep.subr.mxu0 0.0
    %616 = vmatpush1.msra.mxu0 0.0
    %617 = vmatprep.subr.mxu0 0.0
    %618 = vmatpush1.msra.mxu0 0.0
    %619 = vmatprep.subr.mxu0 0.0
    %620 = vmatpush1.msra.mxu0 0.0
    %621 = vmatprep.subr.mxu0 0.0
    %622 = vmatpush1.msra.mxu0 0.0
    %623 = vmatprep.subr.mxu0 0.0
    %624 = vmatpush1.msra.mxu0 0.0
    %625 = vmatprep.subr.mxu0 0.0
    %626 = vmatpush1.msra.mxu0 0.0
    %627 = vmatprep.subr.mxu0 0.0
    %628 = vmatpush1.msra.mxu0 0.0
    %629 = vmatprep.subr.mxu0 0.0
    %630 = vmatpush1.msra.mxu0 0.0
    %631 = vmatprep.subr.mxu0 0.0
    %632 = vmatpush1.msra.mxu0 0.0
    %633 = vmatprep.subr.mxu0 0.0
    %634 = vmatpush1.msra.mxu0 0.0
    %635 = vmatprep.mubr.f32.mxu0 0.0
    %636 = vmatmul.mubr.f32.gmra.mrb[0].mxu0 %v569
    %v637 = vpop.f32.mrb[0].mxu0
    %v638 = vadd.f32 0.0, %v637
    %v639 = vpop.f32.mrb[0].mxu0
    %640 = vdwg.mxu0
    %v641 = vadd.f32 %v565, %v638
    %v642 = vtanh.pop %v641
    %v644 = vrot.slane %v497, 2
    %v645 = vsel %vm120, %v644, 0
    %647 = vmatprep.subr.mxu0 0.0
    %648 = vmatpush1.msra.mxu0 %v20
    %649 = vmatprep.subr.mxu0 0.0
    %650 = vmatpush1.msra.mxu0 %v21
    %651 = vmatprep.subr.mxu0 0.0
    %652 = vmatpush1.msra.mxu0 %v22
    %653 = vmatprep.subr.mxu0 0.0
    %654 = vmatpush1.msra.mxu0 %v23
    %655 = vmatprep.subr.mxu0 0.0
    %656 = vmatpush1.msra.mxu0 0.0
    %657 = vmatprep.subr.mxu0 0.0
    %658 = vmatpush1.msra.mxu0 0.0
    %659 = vmatprep.subr.mxu0 0.0
    %660 = vmatpush1.msra.mxu0 0.0
    %661 = vmatprep.subr.mxu0 0.0
    %662 = vmatpush1.msra.mxu0 0.0
    %663 = vmatprep.subr.mxu0 0.0
    %664 = vmatpush1.msra.mxu0 0.0
    %665 = vmatprep.subr.mxu0 0.0
    %666 = vmatpush1.msra.mxu0 0.0
    %667 = vmatprep.subr.mxu0 0.0
    %668 = vmatpush1.msra.mxu0 0.0
    %669 = vmatprep.subr.mxu0 0.0
    %670 = vmatpush1.msra.mxu0 0.0
    %671 = vmatprep.subr.mxu0 0.0
    %672 = vmatpush1.msra.mxu0 0.0
    %673 = vmatprep.subr.mxu0 0.0
    %674 = vmatpush1.msra.mxu0 0.0
    %675 = vmatprep.subr.mxu0 0.0
    %676 = vmatpush1.msra.mxu0 0.0
    %677 = vmatprep.subr.mxu0 0.0
    %678 = vmatpush1.msra.mxu0 0.0
    %679 = vmatprep.subr.mxu0 0.0
    %680 = vmatpush1.msra.mxu0 0.0
    %681 = vmatprep.subr.mxu0 0.0
    %682 = vmatpush1.msra.mxu0 0.0
    %683 = vmatprep.subr.mxu0 0.0
    %684 = vmatpush1.msra.mxu0 0.0
    %685 = vmatprep.subr.mxu0 0.0
    %686 = vmatpush1.msra.mxu0 0.0
    %687 = vmatprep.subr.mxu0 0.0
    %688 = vmatpush1.msra.mxu0 0.0
    %689 = vmatprep.subr.mxu0 0.0
    %690 = vmatpush1.msra.mxu0 0.0
    %691 = vmatprep.subr.mxu0 0.0
    %692 = vmatpush1.msra.mxu0 0.0
    %693 = vmatprep.subr.mxu0 0.0
    %694 = vmatpush1.msra.mxu0 0.0
    %695 = vmatprep.subr.mxu0 0.0
    %696 = vmatpush1.msra.mxu0 0.0
    %697 = vmatprep.subr.mxu0 0.0
    %698 = vmatpush1.msra.mxu0 0.0
    %699 = vmatprep.subr.mxu0 0.0
    %700 = vmatpush1.msra.mxu0 0.0
    %701 = vmatprep.subr.mxu0 0.0
    %702 = vmatpush1.msra.mxu0 0.0
    %703 = vmatprep.subr.mxu0 0.0
    %704 = vmatpush1.msra.mxu0 0.0
    %705 = vmatprep.subr.mxu0 0.0
    %706 = vmatpush1.msra.mxu0 0.0
    %707 = vmatprep.subr.mxu0 0.0
    %708 = vmatpush1.msra.mxu0 0.0
    %709 = vmatprep.subr.mxu0 0.0
    %710 = vmatpush1.msra.mxu0 0.0
    %711 = vmatprep.mubr.f32.mxu0 0.0
    %712 = vmatmul.mubr.f32.gmra.mrb[0].mxu0 %v645
    %v713 = vpop.f32.mrb[0].mxu0
    %v714 = vadd.f32 0.0, %v713
    %v715 = vpop.f32.mrb[0].mxu0
    %716 = vdwg.mxu0
    %v718 = vrot.slane %v714, 5
    %v720 = vadd.f32 %v115, %v718
    %v721 = vtanh.pop %v720
    %722 = vmatprep.subr.mxu0 0.0
    %723 = vmatpush1.msra.mxu0 %v25
    %724 = vmatprep.subr.mxu0 0.0
    %725 = vmatpush1.msra.mxu0 %v26
    %726 = vmatprep.subr.mxu0 0.0
    %727 = vmatpush1.msra.mxu0 %v27
    %728 = vmatprep.subr.mxu0 0.0
    %729 = vmatpush1.msra.mxu0 %v28
    %730 = vmatprep.subr.mxu0 0.0
    %731 = vmatpush1.msra.mxu0 0.0
    %732 = vmatprep.subr.mxu0 0.0
    %733 = vmatpush1.msra.mxu0 0.0
    %734 = vmatprep.subr.mxu0 0.0
    %735 = vmatpush1.msra.mxu0 0.0
    %736 = vmatprep.subr.mxu0 0.0
    %737 = vmatpush1.msra.mxu0 0.0
    %738 = vmatprep.subr.mxu0 0.0
    %739 = vmatpush1.msra.mxu0 0.0
    %740 = vmatprep.subr.mxu0 0.0
    %741 = vmatpush1.msra.mxu0 0.0
    %742 = vmatprep.subr.mxu0 0.0
    %743 = vmatpush1.msra.mxu0 0.0
    %744 = vmatprep.subr.mxu0 0.0
    %745 = vmatpush1.msra.mxu0 0.0
    %746 = vmatprep.subr.mxu0 0.0
    %747 = vmatpush1.msra.mxu0 0.0
    %748 = vmatprep.subr.mxu0 0.0
    %749 = vmatpush1.msra.mxu0 0.0
    %750 = vmatprep.subr.mxu0 0.0
    %751 = vmatpush1.msra.mxu0 0.0
    %752 = vmatprep.subr.mxu0 0.0
    %753 = vmatpush1.msra.mxu0 0.0
    %754 = vmatprep.subr.mxu0 0.0
    %755 = vmatpush1.msra.mxu0 0.0
    %756 = vmatprep.subr.mxu0 0.0
    %757 = vmatpush1.msra.mxu0 0.0
    %758 = vmatprep.subr.mxu0 0.0
    %759 = vmatpush1.msra.mxu0 0.0
    %760 = vmatprep.subr.mxu0 0.0
    %761 = vmatpush1.msra.mxu0 0.0
    %762 = vmatprep.subr.mxu0 0.0
    %763 = vmatpush1.msra.mxu0 0.0
    %764 = vmatprep.subr.mxu0 0.0
    %765 = vmatpush1.msra.mxu0 0.0
    %766 = vmatprep.subr.mxu0 0.0
    %767 = vmatpush1.msra.mxu0 0.0
    %768 = vmatprep.subr.mxu0 0.0
    %769 = vmatpush1.msra.mxu0 0.0
    %770 = vmatprep.subr.mxu0 0.0
    %771 = vmatpush1.msra.mxu0 0.0
    %772 = vmatprep.subr.mxu0 0.0
    %773 = vmatpush1.msra.mxu0 0.0
    %774 = vmatprep.subr.mxu0 0.0
    %775 = vmatpush1.msra.mxu0 0.0
    %776 = vmatprep.subr.mxu0 0.0
    %777 = vmatpush1.msra.mxu0 0.0
    %778 = vmatprep.subr.mxu0 0.0
    %779 = vmatpush1.msra.mxu0 0.0
    %780 = vmatprep.subr.mxu0 0.0
    %781 = vmatpush1.msra.mxu0 0.0
    %782 = vmatprep.subr.mxu0 0.0
    %783 = vmatpush1.msra.mxu0 0.0
    %784 = vmatprep.subr.mxu0 0.0
    %785 = vmatpush1.msra.mxu0 0.0
    %786 = vmatprep.mubr.f32.mxu0 0.0
    %787 = vmatmul.mubr.f32.gmra.mrb[0].mxu0 %v645
    %v788 = vpop.f32.mrb[0].mxu0
    %v789 = vadd.f32 %v33, %v788
    %v790 = vpop.f32.mrb[0].mxu0
    %791 = vdwg.mxu0
    %v793 = vsel %vm120, %v642, 0
    %795 = vmatprep.subr.mxu0 0.0
    %796 = vmatpush1.msra.mxu0 %v29
    %797 = vmatprep.subr.mxu0 0.0
    %798 = vmatpush1.msra.mxu0 %v30
    %799 = vmatprep.subr.mxu0 0.0
    %800 = vmatpush1.msra.mxu0 %v31
    %801 = vmatprep.subr.mxu0 0.0
    %802 = vmatpush1.msra.mxu0 %v32
    %803 = vmatprep.subr.mxu0 0.0
    %804 = vmatpush1.msra.mxu0 0.0
    %805 = vmatprep.subr.mxu0 0.0
    %806 = vmatpush1.msra.mxu0 0.0
    %807 = vmatprep.subr.mxu0 0.0
    %808 = vmatpush1.msra.mxu0 0.0
    %809 = vmatprep.subr.mxu0 0.0
    %810 = vmatpush1.msra.mxu0 0.0
    %811 = vmatprep.subr.mxu0 0.0
    %812 = vmatpush1.msra.mxu0 0.0
    %813 = vmatprep.subr.mxu0 0.0
    %814 = vmatpush1.msra.mxu0 0.0
    %815 = vmatprep.subr.mxu0 0.0
    %816 = vmatpush1.msra.mxu0 0.0
    %817 = vmatprep.subr.mxu0 0.0
    %818 = vmatpush1.msra.mxu0 0.0
    %819 = vmatprep.subr.mxu0 0.0
    %820 = vmatpush1.msra.mxu0 0.0
    %821 = vmatprep.subr.mxu0 0.0
    %822 = vmatpush1.msra.mxu0 0.0
    %823 = vmatprep.subr.mxu0 0.0
    %824 = vmatpush1.msra.mxu0 0.0
    %825 = vmatprep.subr.mxu0 0.0
    %826 = vmatpush1.msra.mxu0 0.0
    %827 = vmatprep.subr.mxu0 0.0
    %828 = vmatpush1.msra.mxu0 0.0
    %829 = vmatprep.subr.mxu0 0.0
    %830 = vmatpush1.msra.mxu0 0.0
    %831 = vmatprep.subr.mxu0 0.0
    %832 = vmatpush1.msra.mxu0 0.0
    %833 = vmatprep.subr.mxu0 0.0
    %834 = vmatpush1.msra.mxu0 0.0
    %835 = vmatprep.subr.mxu0 0.0
    %836 = vmatpush1.msra.mxu0 0.0
    %837 = vmatprep.subr.mxu0 0.0
    %838 = vmatpush1.msra.mxu0 0.0
    %839 = vmatprep.subr.mxu0 0.0
    %840 = vmatpush1.msra.mxu0 0.0
    %841 = vmatprep.subr.mxu0 0.0
    %842 = vmatpush1.msra.mxu0 0.0
    %843 = vmatprep.subr.mxu0 0.0
    %844 = vmatpush1.msra.mxu0 0.0
    %845 = vmatprep.subr.mxu0 0.0
    %846 = vmatpush1.msra.mxu0 0.0
    %847 = vmatprep.subr.mxu0 0.0
    %848 = vmatpush1.msra.mxu0 0.0
    %849 = vmatprep.subr.mxu0 0.0
    %850 = vmatpush1.msra.mxu0 0.0
    %851 = vmatprep.subr.mxu0 0.0
    %852 = vmatpush1.msra.mxu0 0.0
    %853 = vmatprep.subr.mxu0 0.0
    %854 = vmatpush1.msra.mxu0 0.0
    %855 = vmatprep.subr.mxu0 0.0
    %856 = vmatpush1.msra.mxu0 0.0
    %857 = vmatprep.subr.mxu0 0.0
    %858 = vmatpush1.msra.mxu0 0.0
    %859 = vmatprep.mubr.f32.mxu0 0.0
    %860 = vmatmul.mubr.f32.gmra.mrb[0].mxu0 %v793
    %v861 = vpop.f32.mrb[0].mxu0
    %v862 = vadd.f32 0.0, %v861
    %v863 = vpop.f32.mrb[0].mxu0
    %864 = vdwg.mxu0
    %v865 = vadd.f32 %v789, %v862
    %v866 = vtanh.pop %v865
    %v868 = vrot.slane %v721, 3
    %v869 = vsel %vm120, %v868, 0
    %871 = vmatprep.subr.mxu0 0.0
    %872 = vmatpush1.msra.mxu0 %v20
    %873 = vmatprep.subr.mxu0 0.0
    %874 = vmatpush1.msra.mxu0 %v21
    %875 = vmatprep.subr.mxu0 0.0
    %876 = vmatpush1.msra.mxu0 %v22
    %877 = vmatprep.subr.mxu0 0.0
    %878 = vmatpush1.msra.mxu0 %v23
    %879 = vmatprep.subr.mxu0 0.0
    %880 = vmatpush1.msra.mxu0 0.0
    %881 = vmatprep.subr.mxu0 0.0
    %882 = vmatpush1.msra.mxu0 0.0
    %883 = vmatprep.subr.mxu0 0.0
    %884 = vmatpush1.msra.mxu0 0.0
    %885 = vmatprep.subr.mxu0 0.0
    %886 = vmatpush1.msra.mxu0 0.0
    %887 = vmatprep.subr.mxu0 0.0
    %888 = vmatpush1.msra.mxu0 0.0
    %889 = vmatprep.subr.mxu0 0.0
    %890 = vmatpush1.msra.mxu0 0.0
    %891 = vmatprep.subr.mxu0 0.0
    %892 = vmatpush1.msra.mxu0 0.0
    %893 = vmatprep.subr.mxu0 0.0
    %894 = vmatpush1.msra.mxu0 0.0
    %895 = vmatprep.subr.mxu0 0.0
    %896 = vmatpush1.msra.mxu0 0.0
    %897 = vmatprep.subr.mxu0 0.0
    %898 = vmatpush1.msra.mxu0 0.0
    %899 = vmatprep.subr.mxu0 0.0
    %900 = vmatpush1.msra.mxu0 0.0
    %901 = vmatprep.subr.mxu0 0.0
    %902 = vmatpush1.msra.mxu0 0.0
    %903 = vmatprep.subr.mxu0 0.0
    %904 = vmatpush1.msra.mxu0 0.0
    %905 = vmatprep.subr.mxu0 0.0
    %906 = vmatpush1.msra.mxu0 0.0
    %907 = vmatprep.subr.mxu0 0.0
    %908 = vmatpush1.msra.mxu0 0.0
    %909 = vmatprep.subr.mxu0 0.0
    %910 = vmatpush1.msra.mxu0 0.0
    %911 = vmatprep.subr.mxu0 0.0
    %912 = vmatpush1.msra.mxu0 0.0
    %913 = vmatprep.subr.mxu0 0.0
    %914 = vmatpush1.msra.mxu0 0.0
    %915 = vmatprep.subr.mxu0 0.0
    %916 = vmatpush1.msra.mxu0 0.0
    %917 = vmatprep.subr.mxu0 0.0
    %918 = vmatpush1.msra.mxu0 0.0
    %919 = vmatprep.subr.mxu0 0.0
    %920 = vmatpush1.msra.mxu0 0.0
    %921 = vmatprep.subr.mxu0 0.0
    %922 = vmatpush1.msra.mxu0 0.0
    %923 = vmatprep.subr.mxu0 0.0
    %924 = vmatpush1.msra.mxu0 0.0
    %925 = vmatprep.subr.mxu0 0.0
    %926 = vmatpush1.msra.mxu0 0.0
    %927 = vmatprep.subr.mxu0 0.0
    %928 = vmatpush1.msra.mxu0 0.0
    %929 = vmatprep.subr.mxu0 0.0
    %930 = vmatpush1.msra.mxu0 0.0
    %931 = vmatprep.subr.mxu0 0.0
    %932 = vmatpush1.msra.mxu0 0.0
    %933 = vmatprep.subr.mxu0 0.0
    %934 = vmatpush1.msra.mxu0 0.0
    %935 = vmatprep.mubr.f32.mxu0 0.0
    %936 = vmatmul.mubr.f32.gmra.mrb[0].mxu0 %v869
    %v937 = vpop.f32.mrb[0].mxu0
    %v938 = vadd.f32 0.0, %v937
    %v939 = vpop.f32.mrb[0].mxu0
    %940 = vdwg.mxu0
    %v942 = vrot.slane %v938, 4
    %v944 = vadd.f32 %v115, %v942
    %v945 = vtanh.pop %v944
    %946 = vmatprep.subr.mxu0 0.0
    %947 = vmatpush1.msra.mxu0 %v25
    %948 = vmatprep.subr.mxu0 0.0
    %949 = vmatpush1.msra.mxu0 %v26
    %950 = vmatprep.subr.mxu0 0.0
    %951 = vmatpush1.msra.mxu0 %v27
    %952 = vmatprep.subr.mxu0 0.0
    %953 = vmatpush1.msra.mxu0 %v28
    %954 = vmatprep.subr.mxu0 0.0
    %955 = vmatpush1.msra.mxu0 0.0
    %956 = vmatprep.subr.mxu0 0.0
    %957 = vmatpush1.msra.mxu0 0.0
    %958 = vmatprep.subr.mxu0 0.0
    %959 = vmatpush1.msra.mxu0 0.0
    %960 = vmatprep.subr.mxu0 0.0
    %961 = vmatpush1.msra.mxu0 0.0
    %962 = vmatprep.subr.mxu0 0.0
    %963 = vmatpush1.msra.mxu0 0.0
    %964 = vmatprep.subr.mxu0 0.0
    %965 = vmatpush1.msra.mxu0 0.0
    %966 = vmatprep.subr.mxu0 0.0
    %967 = vmatpush1.msra.mxu0 0.0
    %968 = vmatprep.subr.mxu0 0.0
    %969 = vmatpush1.msra.mxu0 0.0
    %970 = vmatprep.subr.mxu0 0.0
    %971 = vmatpush1.msra.mxu0 0.0
    %972 = vmatprep.subr.mxu0 0.0
    %973 = vmatpush1.msra.mxu0 0.0
    %974 = vmatprep.subr.mxu0 0.0
    %975 = vmatpush1.msra.mxu0 0.0
    %976 = vmatprep.subr.mxu0 0.0
    %977 = vmatpush1.msra.mxu0 0.0
    %978 = vmatprep.subr.mxu0 0.0
    %979 = vmatpush1.msra.mxu0 0.0
    %980 = vmatprep.subr.mxu0 0.0
    %981 = vmatpush1.msra.mxu0 0.0
    %982 = vmatprep.subr.mxu0 0.0
    %983 = vmatpush1.msra.mxu0 0.0
    %984 = vmatprep.subr.mxu0 0.0
    %985 = vmatpush1.msra.mxu0 0.0
    %986 = vmatprep.subr.mxu0 0.0
    %987 = vmatpush1.msra.mxu0 0.0
    %988 = vmatprep.subr.mxu0 0.0
    %989 = vmatpush1.msra.mxu0 0.0
    %990 = vmatprep.subr.mxu0 0.0
    %991 = vmatpush1.msra.mxu0 0.0
    %992 = vmatprep.subr.mxu0 0.0
    %993 = vmatpush1.msra.mxu0 0.0
    %994 = vmatprep.subr.mxu0 0.0
    %995 = vmatpush1.msra.mxu0 0.0
    %996 = vmatprep.subr.mxu0 0.0
    %997 = vmatpush1.msra.mxu0 0.0
    %998 = vmatprep.subr.mxu0 0.0
    %999 = vmatpush1.msra.mxu0 0.0
    %1000 = vmatprep.subr.mxu0 0.0
    %1001 = vmatpush1.msra.mxu0 0.0
    %1002 = vmatprep.subr.mxu0 0.0
    %1003 = vmatpush1.msra.mxu0 0.0
    %1004 = vmatprep.subr.mxu0 0.0
    %1005 = vmatpush1.msra.mxu0 0.0
    %1006 = vmatprep.subr.mxu0 0.0
    %1007 = vmatpush1.msra.mxu0 0.0
    %1008 = vmatprep.subr.mxu0 0.0
    %1009 = vmatpush1.msra.mxu0 0.0
    %1010 = vmatprep.mubr.f32.mxu0 0.0
    %1011 = vmatmul.mubr.f32.gmra.mrb[0].mxu0 %v869
    %v1012 = vpop.f32.mrb[0].mxu0
    %v1013 = vadd.f32 %v33, %v1012
    %v1014 = vpop.f32.mrb[0].mxu0
    %1015 = vdwg.mxu0
    %v1017 = vsel %vm120, %v866, 0
    %1019 = vmatprep.subr.mxu0 0.0
    %1020 = vmatpush1.msra.mxu0 %v29
    %1021 = vmatprep.subr.mxu0 0.0
    %1022 = vmatpush1.msra.mxu0 %v30
    %1023 = vmatprep.subr.mxu0 0.0
    %1024 = vmatpush1.msra.mxu0 %v31
    %1025 = vmatprep.subr.mxu0 0.0
    %1026 = vmatpush1.msra.mxu0 %v32
    %1027 = vmatprep.subr.mxu0 0.0
    %1028 = vmatpush1.msra.mxu0 0.0
    %1029 = vmatprep.subr.mxu0 0.0
    %1030 = vmatpush1.msra.mxu0 0.0
    %1031 = vmatprep.subr.mxu0 0.0
    %1032 = vmatpush1.msra.mxu0 0.0
    %1033 = vmatprep.subr.mxu0 0.0
    %1034 = vmatpush1.msra.mxu0 0.0
    %1035 = vmatprep.subr.mxu0 0.0
    %1036 = vmatpush1.msra.mxu0 0.0
    %1037 = vmatprep.subr.mxu0 0.0
    %1038 = vmatpush1.msra.mxu0 0.0
    %1039 = vmatprep.subr.mxu0 0.0
    %1040 = vmatpush1.msra.mxu0 0.0
    %1041 = vmatprep.subr.mxu0 0.0
    %1042 = vmatpush1.msra.mxu0 0.0
    %1043 = vmatprep.subr.mxu0 0.0
    %1044 = vmatpush1.msra.mxu0 0.0
    %1045 = vmatprep.subr.mxu0 0.0
    %1046 = vmatpush1.msra.mxu0 0.0
    %1047 = vmatprep.subr.mxu0 0.0
    %1048 = vmatpush1.msra.mxu0 0.0
    %1049 = vmatprep.subr.mxu0 0.0
    %1050 = vmatpush1.msra.mxu0 0.0
    %1051 = vmatprep.subr.mxu0 0.0
    %1052 = vmatpush1.msra.mxu0 0.0
    %1053 = vmatprep.subr.mxu0 0.0
    %1054 = vmatpush1.msra.mxu0 0.0
    %1055 = vmatprep.subr.mxu0 0.0
    %1056 = vmatpush1.msra.mxu0 0.0
    %1057 = vmatprep.subr.mxu0 0.0
    %1058 = vmatpush1.msra.mxu0 0.0
    %1059 = vmatprep.subr.mxu0 0.0
    %1060 = vmatpush1.msra.mxu0 0.0
    %1061 = vmatprep.subr.mxu0 0.0
    %1062 = vmatpush1.msra.mxu0 0.0
    %1063 = vmatprep.subr.mxu0 0.0
    %1064 = vmatpush1.msra.mxu0 0.0
    %1065 = vmatprep.subr.mxu0 0.0
    %1066 = vmatpush1.msra.mxu0 0.0
    %1067 = vmatprep.subr.mxu0 0.0
    %1068 = vmatpush1.msra.mxu0 0.0
    %1069 = vmatprep.subr.mxu0 0.0
    %1070 = vmatpush1.msra.mxu0 0.0
    %1071 = vmatprep.subr.mxu0 0.0
    %1072 = vmatpush1.msra.mxu0 0.0
    %1073 = vmatprep.subr.mxu0 0.0
    %1074 = vmatpush1.msra.mxu0 0.0
    %1075 = vmatprep.subr.mxu0 0.0
    %1076 = vmatpush1.msra.mxu0 0.0
    %1077 = vmatprep.subr.mxu0 0.0
    %1078 = vmatpush1.msra.mxu0 0.0
    %1079 = vmatprep.subr.mxu0 0.0
    %1080 = vmatpush1.msra.mxu0 0.0
    %1081 = vmatprep.subr.mxu0 0.0
    %1082 = vmatpush1.msra.mxu0 0.0
    %1083 = vmatprep.mubr.f32.mxu0 0.0
    %1084 = vmatmul.mubr.f32.gmra.mrb[0].mxu0 %v1017
    %v1085 = vpop.f32.mrb[0].mxu0
    %v1086 = vadd.f32 0.0, %v1085
    %v1087 = vpop.f32.mrb[0].mxu0
    %1088 = vdwg.mxu0
    %v1089 = vadd.f32 %v1013, %v1086
    %v1090 = vtanh.pop %v1089
    %v1092 = vrot.slane %v945, 4
    %v1093 = vsel %vm120, %v1092, 0
    %1095 = vmatprep.subr.mxu0 0.0
    %1096 = vmatpush1.msra.mxu0 %v20
    %1097 = vmatprep.subr.mxu0 0.0
    %1098 = vmatpush1.msra.mxu0 %v21
    %1099 = vmatprep.subr.mxu0 0.0
    %1100 = vmatpush1.msra.mxu0 %v22
    %1101 = vmatprep.subr.mxu0 0.0
    %1102 = vmatpush1.msra.mxu0 %v23
    %1103 = vmatprep.subr.mxu0 0.0
    %1104 = vmatpush1.msra.mxu0 0.0
    %1105 = vmatprep.subr.mxu0 0.0
    %1106 = vmatpush1.msra.mxu0 0.0
    %1107 = vmatprep.subr.mxu0 0.0
    %1108 = vmatpush1.msra.mxu0 0.0
    %1109 = vmatprep.subr.mxu0 0.0
    %1110 = vmatpush1.msra.mxu0 0.0
    %1111 = vmatprep.subr.mxu0 0.0
    %1112 = vmatpush1.msra.mxu0 0.0
    %1113 = vmatprep.subr.mxu0 0.0
    %1114 = vmatpush1.msra.mxu0 0.0
    %1115 = vmatprep.subr.mxu0 0.0
    %1116 = vmatpush1.msra.mxu0 0.0
    %1117 = vmatprep.subr.mxu0 0.0
    %1118 = vmatpush1.msra.mxu0 0.0
    %1119 = vmatprep.subr.mxu0 0.0
    %1120 = vmatpush1.msra.mxu0 0.0
    %1121 = vmatprep.subr.mxu0 0.0
    %1122 = vmatpush1.msra.mxu0 0.0
    %1123 = vmatprep.subr.mxu0 0.0
    %1124 = vmatpush1.msra.mxu0 0.0
    %1125 = vmatprep.subr.mxu0 0.0
    %1126 = vmatpush1.msra.mxu0 0.0
    %1127 = vmatprep.subr.mxu0 0.0
    %1128 = vmatpush1.msra.mxu0 0.0
    %1129 = vmatprep.subr.mxu0 0.0
    %1130 = vmatpush1.msra.mxu0 0.0
    %1131 = vmatprep.subr.mxu0 0.0
    %1132 = vmatpush1.msra.mxu0 0.0
    %1133 = vmatprep.subr.mxu0 0.0
    %1134 = vmatpush1.msra.mxu0 0.0
    %1135 = vmatprep.subr.mxu0 0.0
    %1136 = vmatpush1.msra.mxu0 0.0
    %1137 = vmatprep.subr.mxu0 0.0
    %1138 = vmatpush1.msra.mxu0 0.0
    %1139 = vmatprep.subr.mxu0 0.0
    %1140 = vmatpush1.msra.mxu0 0.0
    %1141 = vmatprep.subr.mxu0 0.0
    %1142 = vmatpush1.msra.mxu0 0.0
    %1143 = vmatprep.subr.mxu0 0.0
    %1144 = vmatpush1.msra.mxu0 0.0
    %1145 = vmatprep.subr.mxu0 0.0
    %1146 = vmatpush1.msra.mxu0 0.0
    %1147 = vmatprep.subr.mxu0 0.0
    %1148 = vmatpush1.msra.mxu0 0.0
    %1149 = vmatprep.subr.mxu0 0.0
    %1150 = vmatpush1.msra.mxu0 0.0
    %1151 = vmatprep.subr.mxu0 0.0
    %1152 = vmatpush1.msra.mxu0 0.0
    %1153 = vmatprep.subr.mxu0 0.0
    %1154 = vmatpush1.msra.mxu0 0.0
    %1155 = vmatprep.subr.mxu0 0.0
    %1156 = vmatpush1.msra.mxu0 0.0
    %1157 = vmatprep.subr.mxu0 0.0
    %1158 = vmatpush1.msra.mxu0 0.0
    %1159 = vmatprep.mubr.f32.mxu0 0.0
    %1160 = vmatmul.mubr.f32.gmra.mrb[0].mxu0 %v1093
    %v1161 = vpop.f32.mrb[0].mxu0
    %v1162 = vadd.f32 0.0, %v1161
    %v1163 = vpop.f32.mrb[0].mxu0
    %1164 = vdwg.mxu0
    %v1166 = vrot.slane %v1162, 3
    %v1168 = vadd.f32 %v115, %v1166
    %v1169 = vtanh.pop %v1168
    %1170 = vmatprep.subr.mxu0 0.0
    %1171 = vmatpush1.msra.mxu0 %v25
    %1172 = vmatprep.subr.mxu0 0.0
    %1173 = vmatpush1.msra.mxu0 %v26
    %1174 = vmatprep.subr.mxu0 0.0
    %1175 = vmatpush1.msra.mxu0 %v27
    %1176 = vmatprep.subr.mxu0 0.0
    %1177 = vmatpush1.msra.mxu0 %v28
    %1178 = vmatprep.subr.mxu0 0.0
    %1179 = vmatpush1.msra.mxu0 0.0
    %1180 = vmatprep.subr.mxu0 0.0
    %1181 = vmatpush1.msra.mxu0 0.0
    %1182 = vmatprep.subr.mxu0 0.0
    %1183 = vmatpush1.msra.mxu0 0.0
    %1184 = vmatprep.subr.mxu0 0.0
    %1185 = vmatpush1.msra.mxu0 0.0
    %1186 = vmatprep.subr.mxu0 0.0
    %1187 = vmatpush1.msra.mxu0 0.0
    %1188 = vmatprep.subr.mxu0 0.0
    %1189 = vmatpush1.msra.mxu0 0.0
    %1190 = vmatprep.subr.mxu0 0.0
    %1191 = vmatpush1.msra.mxu0 0.0
    %1192 = vmatprep.subr.mxu0 0.0
    %1193 = vmatpush1.msra.mxu0 0.0
    %1194 = vmatprep.subr.mxu0 0.0
    %1195 = vmatpush1.msra.mxu0 0.0
    %1196 = vmatprep.subr.mxu0 0.0
    %1197 = vmatpush1.msra.mxu0 0.0
    %1198 = vmatprep.subr.mxu0 0.0
    %1199 = vmatpush1.msra.mxu0 0.0
    %1200 = vmatprep.subr.mxu0 0.0
    %1201 = vmatpush1.msra.mxu0 0.0
    %1202 = vmatprep.subr.mxu0 0.0
    %1203 = vmatpush1.msra.mxu0 0.0
    %1204 = vmatprep.subr.mxu0 0.0
    %1205 = vmatpush1.msra.mxu0 0.0
    %1206 = vmatprep.subr.mxu0 0.0
    %1207 = vmatpush1.msra.mxu0 0.0
    %1208 = vmatprep.subr.mxu0 0.0
    %1209 = vmatpush1.msra.mxu0 0.0
    %1210 = vmatprep.subr.mxu0 0.0
    %1211 = vmatpush1.msra.mxu0 0.0
    %1212 = vmatprep.subr.mxu0 0.0
    %1213 = vmatpush1.msra.mxu0 0.0
    %1214 = vmatprep.subr.mxu0 0.0
    %1215 = vmatpush1.msra.mxu0 0.0
    %1216 = vmatprep.subr.mxu0 0.0
    %1217 = vmatpush1.msra.mxu0 0.0
    %1218 = vmatprep.subr.mxu0 0.0
    %1219 = vmatpush1.msra.mxu0 0.0
    %1220 = vmatprep.subr.mxu0 0.0
    %1221 = vmatpush1.msra.mxu0 0.0
    %1222 = vmatprep.subr.mxu0 0.0
    %1223 = vmatpush1.msra.mxu0 0.0
    %1224 = vmatprep.subr.mxu0 0.0
    %1225 = vmatpush1.msra.mxu0 0.0
    %1226 = vmatprep.subr.mxu0 0.0
    %1227 = vmatpush1.msra.mxu0 0.0
    %1228 = vmatprep.subr.mxu0 0.0
    %1229 = vmatpush1.msra.mxu0 0.0
    %1230 = vmatprep.subr.mxu0 0.0
    %1231 = vmatpush1.msra.mxu0 0.0
    %1232 = vmatprep.subr.mxu0 0.0
    %1233 = vmatpush1.msra.mxu0 0.0
    %1234 = vmatprep.mubr.f32.mxu0 0.0
    %1235 = vmatmul.mubr.f32.gmra.mrb[0].mxu0 %v1093
    %v1236 = vpop.f32.mrb[0].mxu0
    %v1237 = vadd.f32 %v33, %v1236
    %v1238 = vpop.f32.mrb[0].mxu0
    %1239 = vdwg.mxu0
    %v1241 = vsel %vm120, %v1090, 0
    %1243 = vmatprep.subr.mxu0 0.0
    %1244 = vmatpush1.msra.mxu0 %v29
    %1245 = vmatprep.subr.mxu0 0.0
    %1246 = vmatpush1.msra.mxu0 %v30
    %1247 = vmatprep.subr.mxu0 0.0
    %1248 = vmatpush1.msra.mxu0 %v31
    %1249 = vmatprep.subr.mxu0 0.0
    %1250 = vmatpush1.msra.mxu0 %v32
    %1251 = vmatprep.subr.mxu0 0.0
    %1252 = vmatpush1.msra.mxu0 0.0
    %1253 = vmatprep.subr.mxu0 0.0
    %1254 = vmatpush1.msra.mxu0 0.0
    %1255 = vmatprep.subr.mxu0 0.0
    %1256 = vmatpush1.msra.mxu0 0.0
    %1257 = vmatprep.subr.mxu0 0.0
    %1258 = vmatpush1.msra.mxu0 0.0
    %1259 = vmatprep.subr.mxu0 0.0
    %1260 = vmatpush1.msra.mxu0 0.0
    %1261 = vmatprep.subr.mxu0 0.0
    %1262 = vmatpush1.msra.mxu0 0.0
    %1263 = vmatprep.subr.mxu0 0.0
    %1264 = vmatpush1.msra.mxu0 0.0
    %1265 = vmatprep.subr.mxu0 0.0
    %1266 = vmatpush1.msra.mxu0 0.0
    %1267 = vmatprep.subr.mxu0 0.0
    %1268 = vmatpush1.msra.mxu0 0.0
    %1269 = vmatprep.subr.mxu0 0.0
    %1270 = vmatpush1.msra.mxu0 0.0
    %1271 = vmatprep.subr.mxu0 0.0
    %1272 = vmatpush1.msra.mxu0 0.0
    %1273 = vmatprep.subr.mxu0 0.0
    %1274 = vmatpush1.msra.mxu0 0.0
    %1275 = vmatprep.subr.mxu0 0.0
    %1276 = vmatpush1.msra.mxu0 0.0
    %1277 = vmatprep.subr.mxu0 0.0
    %1278 = vmatpush1.msra.mxu0 0.0
    %1279 = vmatprep.subr.mxu0 0.0
    %1280 = vmatpush1.msra.mxu0 0.0
    %1281 = vmatprep.subr.mxu0 0.0
    %1282 = vmatpush1.msra.mxu0 0.0
    %1283 = vmatprep.subr.mxu0 0.0
    %1284 = vmatpush1.msra.mxu0 0.0
    %1285 = vmatprep.subr.mxu0 0.0
    %1286 = vmatpush1.msra.mxu0 0.0
    %1287 = vmatprep.subr.mxu0 0.0
    %1288 = vmatpush1.msra.mxu0 0.0
    %1289 = vmatprep.subr.mxu0 0.0
    %1290 = vmatpush1.msra.mxu0 0.0
    %1291 = vmatprep.subr.mxu0 0.0
    %1292 = vmatpush1.msra.mxu0 0.0
    %1293 = vmatprep.subr.mxu0 0.0
    %1294 = vmatpush1.msra.mxu0 0.0
    %1295 = vmatprep.subr.mxu0 0.0
    %1296 = vmatpush1.msra.mxu0 0.0
    %1297 = vmatprep.subr.mxu0 0.0
    %1298 = vmatpush1.msra.mxu0 0.0
    %1299 = vmatprep.subr.mxu0 0.0
    %1300 = vmatpush1.msra.mxu0 0.0
    %1301 = vmatprep.subr.mxu0 0.0
    %1302 = vmatpush1.msra.mxu0 0.0
    %1303 = vmatprep.subr.mxu0 0.0
    %1304 = vmatpush1.msra.mxu0 0.0
    %1305 = vmatprep.subr.mxu0 0.0
    %1306 = vmatpush1.msra.mxu0 0.0
    %1307 = vmatprep.mubr.f32.mxu0 0.0
    %1308 = vmatmul.mubr.f32.gmra.mrb[0].mxu0 %v1241
    %v1309 = vpop.f32.mrb[0].mxu0
    %v1310 = vadd.f32 0.0, %v1309
    %v1311 = vpop.f32.mrb[0].mxu0
    %1312 = vdwg.mxu0
    %v1313 = vadd.f32 %v1237, %v1310
    %v1314 = vtanh.pop %v1313
    %v1316 = vrot.slane %v1169, 5
    %v1317 = vsel %vm120, %v1316, 0
    %1319 = vmatprep.subr.mxu0 0.0
    %1320 = vmatpush1.msra.mxu0 %v20
    %1321 = vmatprep.subr.mxu0 0.0
    %1322 = vmatpush1.msra.mxu0 %v21
    %1323 = vmatprep.subr.mxu0 0.0
    %1324 = vmatpush1.msra.mxu0 %v22
    %1325 = vmatprep.subr.mxu0 0.0
    %1326 = vmatpush1.msra.mxu0 %v23
    %1327 = vmatprep.subr.mxu0 0.0
    %1328 = vmatpush1.msra.mxu0 0.0
    %1329 = vmatprep.subr.mxu0 0.0
    %1330 = vmatpush1.msra.mxu0 0.0
    %1331 = vmatprep.subr.mxu0 0.0
    %1332 = vmatpush1.msra.mxu0 0.0
    %1333 = vmatprep.subr.mxu0 0.0
    %1334 = vmatpush1.msra.mxu0 0.0
    %1335 = vmatprep.subr.mxu0 0.0
    %1336 = vmatpush1.msra.mxu0 0.0
    %1337 = vmatprep.subr.mxu0 0.0
    %1338 = vmatpush1.msra.mxu0 0.0
    %1339 = vmatprep.subr.mxu0 0.0
    %1340 = vmatpush1.msra.mxu0 0.0
    %1341 = vmatprep.subr.mxu0 0.0
    %1342 = vmatpush1.msra.mxu0 0.0
    %1343 = vmatprep.subr.mxu0 0.0
    %1344 = vmatpush1.msra.mxu0 0.0
    %1345 = vmatprep.subr.mxu0 0.0
    %1346 = vmatpush1.msra.mxu0 0.0
    %1347 = vmatprep.subr.mxu0 0.0
    %1348 = vmatpush1.msra.mxu0 0.0
    %1349 = vmatprep.subr.mxu0 0.0
    %1350 = vmatpush1.msra.mxu0 0.0
    %1351 = vmatprep.subr.mxu0 0.0
    %1352 = vmatpush1.msra.mxu0 0.0
    %1353 = vmatprep.subr.mxu0 0.0
    %1354 = vmatpush1.msra.mxu0 0.0
    %1355 = vmatprep.subr.mxu0 0.0
    %1356 = vmatpush1.msra.mxu0 0.0
    %1357 = vmatprep.subr.mxu0 0.0
    %1358 = vmatpush1.msra.mxu0 0.0
    %1359 = vmatprep.subr.mxu0 0.0
    %1360 = vmatpush1.msra.mxu0 0.0
    %1361 = vmatprep.subr.mxu0 0.0
    %1362 = vmatpush1.msra.mxu0 0.0
    %1363 = vmatprep.subr.mxu0 0.0
    %1364 = vmatpush1.msra.mxu0 0.0
    %1365 = vmatprep.subr.mxu0 0.0
    %1366 = vmatpush1.msra.mxu0 0.0
    %1367 = vmatprep.subr.mxu0 0.0
    %1368 = vmatpush1.msra.mxu0 0.0
    %1369 = vmatprep.subr.mxu0 0.0
    %1370 = vmatpush1.msra.mxu0 0.0
    %1371 = vmatprep.subr.mxu0 0.0
    %1372 = vmatpush1.msra.mxu0 0.0
    %1373 = vmatprep.subr.mxu0 0.0
    %1374 = vmatpush1.msra.mxu0 0.0
    %1375 = vmatprep.subr.mxu0 0.0
    %1376 = vmatpush1.msra.mxu0 0.0
    %1377 = vmatprep.subr.mxu0 0.0
    %1378 = vmatpush1.msra.mxu0 0.0
    %1379 = vmatprep.subr.mxu0 0.0
    %1380 = vmatpush1.msra.mxu0 0.0
    %1381 = vmatprep.subr.mxu0 0.0
    %1382 = vmatpush1.msra.mxu0 0.0
    %1383 = vmatprep.mubr.f32.mxu0 0.0
    %1384 = vmatmul.mubr.f32.gmra.mrb[0].mxu0 %v1317
    %v1385 = vpop.f32.mrb[0].mxu0
    %v1386 = vadd.f32 0.0, %v1385
    %v1387 = vpop.f32.mrb[0].mxu0
    %1388 = vdwg.mxu0
    %v1390 = vrot.slane %v1386, 2
    %v1392 = vadd.f32 %v115, %v1390
    %v1393 = vtanh.pop %v1392
    %1394 = vmatprep.subr.mxu0 0.0
    %1395 = vmatpush1.msra.mxu0 %v25
    %1396 = vmatprep.subr.mxu0 0.0
    %1397 = vmatpush1.msra.mxu0 %v26
    %1398 = vmatprep.subr.mxu0 0.0
    %1399 = vmatpush1.msra.mxu0 %v27
    %1400 = vmatprep.subr.mxu0 0.0
    %1401 = vmatpush1.msra.mxu0 %v28
    %1402 = vmatprep.subr.mxu0 0.0
    %1403 = vmatpush1.msra.mxu0 0.0
    %1404 = vmatprep.subr.mxu0 0.0
    %1405 = vmatpush1.msra.mxu0 0.0
    %1406 = vmatprep.subr.mxu0 0.0
    %1407 = vmatpush1.msra.mxu0 0.0
    %1408 = vmatprep.subr.mxu0 0.0
    %1409 = vmatpush1.msra.mxu0 0.0
    %1410 = vmatprep.subr.mxu0 0.0
    %1411 = vmatpush1.msra.mxu0 0.0
    %1412 = vmatprep.subr.mxu0 0.0
    %1413 = vmatpush1.msra.mxu0 0.0
    %1414 = vmatprep.subr.mxu0 0.0
    %1415 = vmatpush1.msra.mxu0 0.0
    %1416 = vmatprep.subr.mxu0 0.0
    %1417 = vmatpush1.msra.mxu0 0.0
    %1418 = vmatprep.subr.mxu0 0.0
    %1419 = vmatpush1.msra.mxu0 0.0
    %1420 = vmatprep.subr.mxu0 0.0
    %1421 = vmatpush1.msra.mxu0 0.0
    %1422 = vmatprep.subr.mxu0 0.0
    %1423 = vmatpush1.msra.mxu0 0.0
    %1424 = vmatprep.subr.mxu0 0.0
    %1425 = vmatpush1.msra.mxu0 0.0
    %1426 = vmatprep.subr.mxu0 0.0
    %1427 = vmatpush1.msra.mxu0 0.0
    %1428 = vmatprep.subr.mxu0 0.0
    %1429 = vmatpush1.msra.mxu0 0.0
    %1430 = vmatprep.subr.mxu0 0.0
    %1431 = vmatpush1.msra.mxu0 0.0
    %1432 = vmatprep.subr.mxu0 0.0
    %1433 = vmatpush1.msra.mxu0 0.0
    %1434 = vmatprep.subr.mxu0 0.0
    %1435 = vmatpush1.msra.mxu0 0.0
    %1436 = vmatprep.subr.mxu0 0.0
    %1437 = vmatpush1.msra.mxu0 0.0
    %1438 = vmatprep.subr.mxu0 0.0
    %1439 = vmatpush1.msra.mxu0 0.0
    %1440 = vmatprep.subr.mxu0 0.0
    %1441 = vmatpush1.msra.mxu0 0.0
    %1442 = vmatprep.subr.mxu0 0.0
    %1443 = vmatpush1.msra.mxu0 0.0
    %1444 = vmatprep.subr.mxu0 0.0
    %1445 = vmatpush1.msra.mxu0 0.0
    %1446 = vmatprep.subr.mxu0 0.0
    %1447 = vmatpush1.msra.mxu0 0.0
    %1448 = vmatprep.subr.mxu0 0.0
    %1449 = vmatpush1.msra.mxu0 0.0
    %1450 = vmatprep.subr.mxu0 0.0
    %1451 = vmatpush1.msra.mxu0 0.0
    %1452 = vmatprep.subr.mxu0 0.0
    %1453 = vmatpush1.msra.mxu0 0.0
    %1454 = vmatprep.subr.mxu0 0.0
    %1455 = vmatpush1.msra.mxu0 0.0
    %1456 = vmatprep.subr.mxu0 0.0
    %1457 = vmatpush1.msra.mxu0 0.0
    %1458 = vmatprep.mubr.f32.mxu0 0.0
    %1459 = vmatmul.mubr.f32.gmra.mrb[0].mxu0 %v1317
    %v1460 = vpop.f32.mrb[0].mxu0
    %v1461 = vadd.f32 %v33, %v1460
    %v1462 = vpop.f32.mrb[0].mxu0
    %1463 = vdwg.mxu0
    %v1465 = vsel %vm120, %v1314, 0
    %1467 = vmatprep.subr.mxu0 0.0
    %1468 = vmatpush1.msra.mxu0 %v29
    %1469 = vmatprep.subr.mxu0 0.0
    %1470 = vmatpush1.msra.mxu0 %v30
    %1471 = vmatprep.subr.mxu0 0.0
    %1472 = vmatpush1.msra.mxu0 %v31
    %1473 = vmatprep.subr.mxu0 0.0
    %1474 = vmatpush1.msra.mxu0 %v32
    %1475 = vmatprep.subr.mxu0 0.0
    %1476 = vmatpush1.msra.mxu0 0.0
    %1477 = vmatprep.subr.mxu0 0.0
    %1478 = vmatpush1.msra.mxu0 0.0
    %1479 = vmatprep.subr.mxu0 0.0
    %1480 = vmatpush1.msra.mxu0 0.0
    %1481 = vmatprep.subr.mxu0 0.0
    %1482 = vmatpush1.msra.mxu0 0.0
    %1483 = vmatprep.subr.mxu0 0.0
    %1484 = vmatpush1.msra.mxu0 0.0
    %1485 = vmatprep.subr.mxu0 0.0
    %1486 = vmatpush1.msra.mxu0 0.0
    %1487 = vmatprep.subr.mxu0 0.0
    %1488 = vmatpush1.msra.mxu0 0.0
    %1489 = vmatprep.subr.mxu0 0.0
    %1490 = vmatpush1.msra.mxu0 0.0
    %1491 = vmatprep.subr.mxu0 0.0
    %1492 = vmatpush1.msra.mxu0 0.0
    %1493 = vmatprep.subr.mxu0 0.0
    %1494 = vmatpush1.msra.mxu0 0.0
    %1495 = vmatprep.subr.mxu0 0.0
    %1496 = vmatpush1.msra.mxu0 0.0
    %1497 = vmatprep.subr.mxu0 0.0
    %1498 = vmatpush1.msra.mxu0 0.0
    %1499 = vmatprep.subr.mxu0 0.0
    %1500 = vmatpush1.msra.mxu0 0.0
    %1501 = vmatprep.subr.mxu0 0.0
    %1502 = vmatpush1.msra.mxu0 0.0
    %1503 = vmatprep.subr.mxu0 0.0
    %1504 = vmatpush1.msra.mxu0 0.0
    %1505 = vmatprep.subr.mxu0 0.0
    %1506 = vmatpush1.msra.mxu0 0.0
    %1507 = vmatprep.subr.mxu0 0.0
    %1508 = vmatpush1.msra.mxu0 0.0
    %1509 = vmatprep.subr.mxu0 0.0
    %1510 = vmatpush1.msra.mxu0 0.0
    %1511 = vmatprep.subr.mxu0 0.0
    %1512 = vmatpush1.msra.mxu0 0.0
    %1513 = vmatprep.subr.mxu0 0.0
    %1514 = vmatpush1.msra.mxu0 0.0
    %1515 = vmatprep.subr.mxu0 0.0
    %1516 = vmatpush1.msra.mxu0 0.0
    %1517 = vmatprep.subr.mxu0 0.0
    %1518 = vmatpush1.msra.mxu0 0.0
    %1519 = vmatprep.subr.mxu0 0.0
    %1520 = vmatpush1.msra.mxu0 0.0
    %1521 = vmatprep.subr.mxu0 0.0
    %1522 = vmatpush1.msra.mxu0 0.0
    %1523 = vmatprep.subr.mxu0 0.0
    %1524 = vmatpush1.msra.mxu0 0.0
    %1525 = vmatprep.subr.mxu0 0.0
    %1526 = vmatpush1.msra.mxu0 0.0
    %1527 = vmatprep.subr.mxu0 0.0
    %1528 = vmatpush1.msra.mxu0 0.0
    %1529 = vmatprep.subr.mxu0 0.0
    %1530 = vmatpush1.msra.mxu0 0.0
    %1531 = vmatprep.mubr.f32.mxu0 0.0
    %1532 = vmatmul.mubr.f32.gmra.mrb[0].mxu0 %v1465
    %v1533 = vpop.f32.mrb[0].mxu0
    %v1534 = vadd.f32 0.0, %v1533
    %v1535 = vpop.f32.mrb[0].mxu0
    %1536 = vdwg.mxu0
    %v1537 = vadd.f32 %v1461, %v1534
    %v1538 = vtanh.pop %v1537
    %v1540 = vrot.slane %v1393, 6
    %v1541 = vsel %vm120, %v1540, 0
    %1543 = vmatprep.subr.mxu0 0.0
    %1544 = vmatpush1.msra.mxu0 %v20
    %1545 = vmatprep.subr.mxu0 0.0
    %1546 = vmatpush1.msra.mxu0 %v21
    %1547 = vmatprep.subr.mxu0 0.0
    %1548 = vmatpush1.msra.mxu0 %v22
    %1549 = vmatprep.subr.mxu0 0.0
    %1550 = vmatpush1.msra.mxu0 %v23
    %1551 = vmatprep.subr.mxu0 0.0
    %1552 = vmatpush1.msra.mxu0 0.0
    %1553 = vmatprep.subr.mxu0 0.0
    %1554 = vmatpush1.msra.mxu0 0.0
    %1555 = vmatprep.subr.mxu0 0.0
    %1556 = vmatpush1.msra.mxu0 0.0
    %1557 = vmatprep.subr.mxu0 0.0
    %1558 = vmatpush1.msra.mxu0 0.0
    %1559 = vmatprep.subr.mxu0 0.0
    %1560 = vmatpush1.msra.mxu0 0.0
    %1561 = vmatprep.subr.mxu0 0.0
    %1562 = vmatpush1.msra.mxu0 0.0
    %1563 = vmatprep.subr.mxu0 0.0
    %1564 = vmatpush1.msra.mxu0 0.0
    %1565 = vmatprep.subr.mxu0 0.0
    %1566 = vmatpush1.msra.mxu0 0.0
    %1567 = vmatprep.subr.mxu0 0.0
    %1568 = vmatpush1.msra.mxu0 0.0
    %1569 = vmatprep.subr.mxu0 0.0
    %1570 = vmatpush1.msra.mxu0 0.0
    %1571 = vmatprep.subr.mxu0 0.0
    %1572 = vmatpush1.msra.mxu0 0.0
    %1573 = vmatprep.subr.mxu0 0.0
    %1574 = vmatpush1.msra.mxu0 0.0
    %1575 = vmatprep.subr.mxu0 0.0
    %1576 = vmatpush1.msra.mxu0 0.0
    %1577 = vmatprep.subr.mxu0 0.0
    %1578 = vmatpush1.msra.mxu0 0.0
    %1579 = vmatprep.subr.mxu0 0.0
    %1580 = vmatpush1.msra.mxu0 0.0
    %1581 = vmatprep.subr.mxu0 0.0
    %1582 = vmatpush1.msra.mxu0 0.0
    %1583 = vmatprep.subr.mxu0 0.0
    %1584 = vmatpush1.msra.mxu0 0.0
    %1585 = vmatprep.subr.mxu0 0.0
    %1586 = vmatpush1.msra.mxu0 0.0
    %1587 = vmatprep.subr.mxu0 0.0
    %1588 = vmatpush1.msra.mxu0 0.0
    %1589 = vmatprep.subr.mxu0 0.0
    %1590 = vmatpush1.msra.mxu0 0.0
    %1591 = vmatprep.subr.mxu0 0.0
    %1592 = vmatpush1.msra.mxu0 0.0
    %1593 = vmatprep.subr.mxu0 0.0
    %1594 = vmatpush1.msra.mxu0 0.0
    %1595 = vmatprep.subr.mxu0 0.0
    %1596 = vmatpush1.msra.mxu0 0.0
    %1597 = vmatprep.subr.mxu0 0.0
    %1598 = vmatpush1.msra.mxu0 0.0
    %1599 = vmatprep.subr.mxu0 0.0
    %1600 = vmatpush1.msra.mxu0 0.0
    %1601 = vmatprep.subr.mxu0 0.0
    %1602 = vmatpush1.msra.mxu0 0.0
    %1603 = vmatprep.subr.mxu0 0.0
    %1604 = vmatpush1.msra.mxu0 0.0
    %1605 = vmatprep.subr.mxu0 0.0
    %1606 = vmatpush1.msra.mxu0 0.0
    %1607 = vmatprep.mubr.f32.mxu0 0.0
    %1608 = vmatmul.mubr.f32.gmra.mrb[0].mxu0 %v1541
    %v1609 = vpop.f32.mrb[0].mxu0
    %v1610 = vadd.f32 0.0, %v1609
    %v1611 = vpop.f32.mrb[0].mxu0
    %1612 = vdwg.mxu0
    %v1614 = vrot.slane %v1610, 1
    %v1616 = vadd.f32 %v115, %v1614
    %v1617 = vtanh.pop %v1616
    %1618 = vmatprep.subr.mxu0 0.0
    %1619 = vmatpush1.msra.mxu0 %v25
    %1620 = vmatprep.subr.mxu0 0.0
    %1621 = vmatpush1.msra.mxu0 %v26
    %1622 = vmatprep.subr.mxu0 0.0
    %1623 = vmatpush1.msra.mxu0 %v27
    %1624 = vmatprep.subr.mxu0 0.0
    %1625 = vmatpush1.msra.mxu0 %v28
    %1626 = vmatprep.subr.mxu0 0.0
    %1627 = vmatpush1.msra.mxu0 0.0
    %1628 = vmatprep.subr.mxu0 0.0
    %1629 = vmatpush1.msra.mxu0 0.0
    %1630 = vmatprep.subr.mxu0 0.0
    %1631 = vmatpush1.msra.mxu0 0.0
    %1632 = vmatprep.subr.mxu0 0.0
    %1633 = vmatpush1.msra.mxu0 0.0
    %1634 = vmatprep.subr.mxu0 0.0
    %1635 = vmatpush1.msra.mxu0 0.0
    %1636 = vmatprep.subr.mxu0 0.0
    %1637 = vmatpush1.msra.mxu0 0.0
    %1638 = vmatprep.subr.mxu0 0.0
    %1639 = vmatpush1.msra.mxu0 0.0
    %1640 = vmatprep.subr.mxu0 0.0
    %1641 = vmatpush1.msra.mxu0 0.0
    %1642 = vmatprep.subr.mxu0 0.0
    %1643 = vmatpush1.msra.mxu0 0.0
    %1644 = vmatprep.subr.mxu0 0.0
    %1645 = vmatpush1.msra.mxu0 0.0
    %1646 = vmatprep.subr.mxu0 0.0
    %1647 = vmatpush1.msra.mxu0 0.0
    %1648 = vmatprep.subr.mxu0 0.0
    %1649 = vmatpush1.msra.mxu0 0.0
    %1650 = vmatprep.subr.mxu0 0.0
    %1651 = vmatpush1.msra.mxu0 0.0
    %1652 = vmatprep.subr.mxu0 0.0
    %1653 = vmatpush1.msra.mxu0 0.0
    %1654 = vmatprep.subr.mxu0 0.0
    %1655 = vmatpush1.msra.mxu0 0.0
    %1656 = vmatprep.subr.mxu0 0.0
    %1657 = vmatpush1.msra.mxu0 0.0
    %1658 = vmatprep.subr.mxu0 0.0
    %1659 = vmatpush1.msra.mxu0 0.0
    %1660 = vmatprep.subr.mxu0 0.0
    %1661 = vmatpush1.msra.mxu0 0.0
    %1662 = vmatprep.subr.mxu0 0.0
    %1663 = vmatpush1.msra.mxu0 0.0
    %1664 = vmatprep.subr.mxu0 0.0
    %1665 = vmatpush1.msra.mxu0 0.0
    %1666 = vmatprep.subr.mxu0 0.0
    %1667 = vmatpush1.msra.mxu0 0.0
    %1668 = vmatprep.subr.mxu0 0.0
    %1669 = vmatpush1.msra.mxu0 0.0
    %1670 = vmatprep.subr.mxu0 0.0
    %1671 = vmatpush1.msra.mxu0 0.0
    %1672 = vmatprep.subr.mxu0 0.0
    %1673 = vmatpush1.msra.mxu0 0.0
    %1674 = vmatprep.subr.mxu0 0.0
    %1675 = vmatpush1.msra.mxu0 0.0
    %1676 = vmatprep.subr.mxu0 0.0
    %1677 = vmatpush1.msra.mxu0 0.0
    %1678 = vmatprep.subr.mxu0 0.0
    %1679 = vmatpush1.msra.mxu0 0.0
    %1680 = vmatprep.subr.mxu0 0.0
    %1681 = vmatpush1.msra.mxu0 0.0
    %1682 = vmatprep.mubr.f32.mxu0 0.0
    %1683 = vmatmul.mubr.f32.gmra.mrb[0].mxu0 %v1541
    %v1684 = vpop.f32.mrb[0].mxu0
    %v1685 = vadd.f32 %v33, %v1684
    %v1686 = vpop.f32.mrb[0].mxu0
    %1687 = vdwg.mxu0
    %v1689 = vsel %vm120, %v1538, 0
    %1691 = vmatprep.subr.mxu0 0.0
    %1692 = vmatpush1.msra.mxu0 %v29
    %1693 = vmatprep.subr.mxu0 0.0
    %1694 = vmatpush1.msra.mxu0 %v30
    %1695 = vmatprep.subr.mxu0 0.0
    %1696 = vmatpush1.msra.mxu0 %v31
    %1697 = vmatprep.subr.mxu0 0.0
    %1698 = vmatpush1.msra.mxu0 %v32
    %1699 = vmatprep.subr.mxu0 0.0
    %1700 = vmatpush1.msra.mxu0 0.0
    %1701 = vmatprep.subr.mxu0 0.0
    %1702 = vmatpush1.msra.mxu0 0.0
    %1703 = vmatprep.subr.mxu0 0.0
    %1704 = vmatpush1.msra.mxu0 0.0
    %1705 = vmatprep.subr.mxu0 0.0
    %1706 = vmatpush1.msra.mxu0 0.0
    %1707 = vmatprep.subr.mxu0 0.0
    %1708 = vmatpush1.msra.mxu0 0.0
    %1709 = vmatprep.subr.mxu0 0.0
    %1710 = vmatpush1.msra.mxu0 0.0
    %1711 = vmatprep.subr.mxu0 0.0
    %1712 = vmatpush1.msra.mxu0 0.0
    %1713 = vmatprep.subr.mxu0 0.0
    %1714 = vmatpush1.msra.mxu0 0.0
    %1715 = vmatprep.subr.mxu0 0.0
    %1716 = vmatpush1.msra.mxu0 0.0
    %1717 = vmatprep.subr.mxu0 0.0
    %1718 = vmatpush1.msra.mxu0 0.0
    %1719 = vmatprep.subr.mxu0 0.0
    %1720 = vmatpush1.msra.mxu0 0.0
    %1721 = vmatprep.subr.mxu0 0.0
    %1722 = vmatpush1.msra.mxu0 0.0
    %1723 = vmatprep.subr.mxu0 0.0
    %1724 = vmatpush1.msra.mxu0 0.0
    %1725 = vmatprep.subr.mxu0 0.0
    %1726 = vmatpush1.msra.mxu0 0.0
    %1727 = vmatprep.subr.mxu0 0.0
    %1728 = vmatpush1.msra.mxu0 0.0
    %1729 = vmatprep.subr.mxu0 0.0
    %1730 = vmatpush1.msra.mxu0 0.0
    %1731 = vmatprep.subr.mxu0 0.0
    %1732 = vmatpush1.msra.mxu0 0.0
    %1733 = vmatprep.subr.mxu0 0.0
    %1734 = vmatpush1.msra.mxu0 0.0
    %1735 = vmatprep.subr.mxu0 0.0
    %1736 = vmatpush1.msra.mxu0 0.0
    %1737 = vmatprep.subr.mxu0 0.0
    %1738 = vmatpush1.msra.mxu0 0.0
    %1739 = vmatprep.subr.mxu0 0.0
    %1740 = vmatpush1.msra.mxu0 0.0
    %1741 = vmatprep.subr.mxu0 0.0
    %1742 = vmatpush1.msra.mxu0 0.0
    %1743 = vmatprep.subr.mxu0 0.0
    %1744 = vmatpush1.msra.mxu0 0.0
    %1745 = vmatprep.subr.mxu0 0.0
    %1746 = vmatpush1.msra.mxu0 0.0
    %1747 = vmatprep.subr.mxu0 0.0
    %1748 = vmatpush1.msra.mxu0 0.0
    %1749 = vmatprep.subr.mxu0 0.0
    %1750 = vmatpush1.msra.mxu0 0.0
    %1751 = vmatprep.subr.mxu0 0.0
    %1752 = vmatpush1.msra.mxu0 0.0
    %1753 = vmatprep.subr.mxu0 0.0
    %1754 = vmatpush1.msra.mxu0 0.0
    %1755 = vmatprep.mubr.f32.mxu0 0.0
    %1756 = vmatmul.mubr.f32.gmra.mrb[0].mxu0 %v1689
    %v1757 = vpop.f32.mrb[0].mxu0
    %v1758 = vadd.f32 0.0, %v1757
    %v1759 = vpop.f32.mrb[0].mxu0
    %1760 = vdwg.mxu0
    %v1761 = vadd.f32 %v1685, %v1758
    %v1762 = vtanh.pop %v1761
    %v1764 = vrot.slane %v1617, 7
    %v1765 = vsel %vm120, %v1764, 0
    %1767 = vmatprep.subr.mxu0 0.0
    %1768 = vmatpush1.msra.mxu0 %v25
    %1769 = vmatprep.subr.mxu0 0.0
    %1770 = vmatpush1.msra.mxu0 %v26
    %1771 = vmatprep.subr.mxu0 0.0
    %1772 = vmatpush1.msra.mxu0 %v27
    %1773 = vmatprep.subr.mxu0 0.0
    %1774 = vmatpush1.msra.mxu0 %v28
    %1775 = vmatprep.subr.mxu0 0.0
    %1776 = vmatpush1.msra.mxu0 0.0
    %1777 = vmatprep.subr.mxu0 0.0
    %1778 = vmatpush1.msra.mxu0 0.0
    %1779 = vmatprep.subr.mxu0 0.0
    %1780 = vmatpush1.msra.mxu0 0.0
    %1781 = vmatprep.subr.mxu0 0.0
    %1782 = vmatpush1.msra.mxu0 0.0
    %1783 = vmatprep.subr.mxu0 0.0
    %1784 = vmatpush1.msra.mxu0 0.0
    %1785 = vmatprep.subr.mxu0 0.0
    %1786 = vmatpush1.msra.mxu0 0.0
    %1787 = vmatprep.subr.mxu0 0.0
    %1788 = vmatpush1.msra.mxu0 0.0
    %1789 = vmatprep.subr.mxu0 0.0
    %1790 = vmatpush1.msra.mxu0 0.0
    %1791 = vmatprep.subr.mxu0 0.0
    %1792 = vmatpush1.msra.mxu0 0.0
    %1793 = vmatprep.subr.mxu0 0.0
    %1794 = vmatpush1.msra.mxu0 0.0
    %1795 = vmatprep.subr.mxu0 0.0
    %1796 = vmatpush1.msra.mxu0 0.0
    %1797 = vmatprep.subr.mxu0 0.0
    %1798 = vmatpush1.msra.mxu0 0.0
    %1799 = vmatprep.subr.mxu0 0.0
    %1800 = vmatpush1.msra.mxu0 0.0
    %1801 = vmatprep.subr.mxu0 0.0
    %1802 = vmatpush1.msra.mxu0 0.0
    %1803 = vmatprep.subr.mxu0 0.0
    %1804 = vmatpush1.msra.mxu0 0.0
    %1805 = vmatprep.subr.mxu0 0.0
    %1806 = vmatpush1.msra.mxu0 0.0
    %1807 = vmatprep.subr.mxu0 0.0
    %1808 = vmatpush1.msra.mxu0 0.0
    %1809 = vmatprep.subr.mxu0 0.0
    %1810 = vmatpush1.msra.mxu0 0.0
    %1811 = vmatprep.subr.mxu0 0.0
    %1812 = vmatpush1.msra.mxu0 0.0
    %1813 = vmatprep.subr.mxu0 0.0
    %1814 = vmatpush1.msra.mxu0 0.0
    %1815 = vmatprep.subr.mxu0 0.0
    %1816 = vmatpush1.msra.mxu0 0.0
    %1817 = vmatprep.subr.mxu0 0.0
    %1818 = vmatpush1.msra.mxu0 0.0
    %1819 = vmatprep.subr.mxu0 0.0
    %1820 = vmatpush1.msra.mxu0 0.0
    %1821 = vmatprep.subr.mxu0 0.0
    %1822 = vmatpush1.msra.mxu0 0.0
    %1823 = vmatprep.subr.mxu0 0.0
    %1824 = vmatpush1.msra.mxu0 0.0
    %1825 = vmatprep.subr.mxu0 0.0
    %1826 = vmatpush1.msra.mxu0 0.0
    %1827 = vmatprep.subr.mxu0 0.0
    %1828 = vmatpush1.msra.mxu0 0.0
    %1829 = vmatprep.subr.mxu0 0.0
    %1830 = vmatpush1.msra.mxu0 0.0
    %1831 = vmatprep.mubr.f32.mxu0 0.0
    %1832 = vmatmul.mubr.f32.gmra.mrb[0].mxu0 %v1765
    %v1833 = vpop.f32.mrb[0].mxu0
    %v1834 = vadd.f32 %v33, %v1833
    %v1835 = vpop.f32.mrb[0].mxu0
    %1836 = vdwg.mxu0
    %v1838 = vsel %vm120, %v1762, 0
    %1840 = vmatprep.subr.mxu0 0.0
    %1841 = vmatpush1.msra.mxu0 %v29
    %1842 = vmatprep.subr.mxu0 0.0
    %1843 = vmatpush1.msra.mxu0 %v30
    %1844 = vmatprep.subr.mxu0 0.0
    %1845 = vmatpush1.msra.mxu0 %v31
    %1846 = vmatprep.subr.mxu0 0.0
    %1847 = vmatpush1.msra.mxu0 %v32
    %1848 = vmatprep.subr.mxu0 0.0
    %1849 = vmatpush1.msra.mxu0 0.0
    %1850 = vmatprep.subr.mxu0 0.0
    %1851 = vmatpush1.msra.mxu0 0.0
    %1852 = vmatprep.subr.mxu0 0.0
    %1853 = vmatpush1.msra.mxu0 0.0
    %1854 = vmatprep.subr.mxu0 0.0
    %1855 = vmatpush1.msra.mxu0 0.0
    %1856 = vmatprep.subr.mxu0 0.0
    %1857 = vmatpush1.msra.mxu0 0.0
    %1858 = vmatprep.subr.mxu0 0.0
    %1859 = vmatpush1.msra.mxu0 0.0
    %1860 = vmatprep.subr.mxu0 0.0
    %1861 = vmatpush1.msra.mxu0 0.0
    %1862 = vmatprep.subr.mxu0 0.0
    %1863 = vmatpush1.msra.mxu0 0.0
    %1864 = vmatprep.subr.mxu0 0.0
    %1865 = vmatpush1.msra.mxu0 0.0
    %1866 = vmatprep.subr.mxu0 0.0
    %1867 = vmatpush1.msra.mxu0 0.0
    %1868 = vmatprep.subr.mxu0 0.0
    %1869 = vmatpush1.msra.mxu0 0.0
    %1870 = vmatprep.subr.mxu0 0.0
    %1871 = vmatpush1.msra.mxu0 0.0
    %1872 = vmatprep.subr.mxu0 0.0
    %1873 = vmatpush1.msra.mxu0 0.0
    %1874 = vmatprep.subr.mxu0 0.0
    %1875 = vmatpush1.msra.mxu0 0.0
    %1876 = vmatprep.subr.mxu0 0.0
    %1877 = vmatpush1.msra.mxu0 0.0
    %1878 = vmatprep.subr.mxu0 0.0
    %1879 = vmatpush1.msra.mxu0 0.0
    %1880 = vmatprep.subr.mxu0 0.0
    %1881 = vmatpush1.msra.mxu0 0.0
    %1882 = vmatprep.subr.mxu0 0.0
    %1883 = vmatpush1.msra.mxu0 0.0
    %1884 = vmatprep.subr.mxu0 0.0
    %1885 = vmatpush1.msra.mxu0 0.0
    %1886 = vmatprep.subr.mxu0 0.0
    %1887 = vmatpush1.msra.mxu0 0.0
    %1888 = vmatprep.subr.mxu0 0.0
    %1889 = vmatpush1.msra.mxu0 0.0
    %1890 = vmatprep.subr.mxu0 0.0
    %1891 = vmatpush1.msra.mxu0 0.0
    %1892 = vmatprep.subr.mxu0 0.0
    %1893 = vmatpush1.msra.mxu0 0.0
    %1894 = vmatprep.subr.mxu0 0.0
    %1895 = vmatpush1.msra.mxu0 0.0
    %1896 = vmatprep.subr.mxu0 0.0
    %1897 = vmatpush1.msra.mxu0 0.0
    %1898 = vmatprep.subr.mxu0 0.0
    %1899 = vmatpush1.msra.mxu0 0.0
    %1900 = vmatprep.subr.mxu0 0.0
    %1901 = vmatpush1.msra.mxu0 0.0
    %1902 = vmatprep.subr.mxu0 0.0
    %1903 = vmatpush1.msra.mxu0 0.0
    %1904 = vmatprep.mubr.f32.mxu0 0.0
    %1905 = vmatmul.mubr.f32.gmra.mrb[0].mxu0 %v1838
    %v1906 = vpop.f32.mrb[0].mxu0
    %v1907 = vadd.f32 0.0, %v1906
    %v1908 = vpop.f32.mrb[0].mxu0
    %1909 = vdwg.mxu0
    %v1910 = vadd.f32 %v1834, %v1907
    %v1911 = vtanh.pop %v1910
    %v1912 = vrot.slane %v642, 7
    %v1914 = vrot.slane %v866, 6
    %v1916 = vrot.slane %v1090, 5
    %v1918 = vrot.slane %v1314, 4
    %v1920 = vrot.slane %v1538, 3
    %v1922 = vrot.slane %v1762, 2
    %v1925 = vrot.slane %v1911, 1
    %vm1927 = vcmask 1040384
    %v1928 = vsel %vm1927, %v418, %v1912
    %vm1929 = vcmask 1041408
    %v1930 = vsel %vm1929, %v1928, %v1914
    %vm1931 = vcmask 1042432
    %v1932 = vsel %vm1931, %v1930, %v1916
    %vm1933 = vcmask 1043456
    %v1934 = vsel %vm1933, %v1932, %v1918
    %vm1935 = vcmask 1044480
    %v1936 = vsel %vm1935, %v1934, %v1920
    %vm1937 = vcmask 1045504
    %v1938 = vsel %vm1937, %v1936, %v1922
    %vm1939 = vcmask 1046528
    %v1940 = vsel %vm1939, %v1938, %v1925
    %v1941 = vlaneseq
    %v1942 = vshrl.u32 %v1941, 7
    %v1943 = vsub.s32 0, %v1942
    %v1944 = vrot.slane %v38, %v1943
    %v1946 = vsel %vm120, %v1940, 0
    %1948 = vmatprep.subr.mxu0 0.0
    %1949 = vmatpush1.msra.mxu0 %v34
    %1950 = vmatprep.subr.mxu0 0.0
    %1951 = vmatpush1.msra.mxu0 %v35
    %1952 = vmatprep.subr.mxu0 0.0
    %1953 = vmatpush1.msra.mxu0 %v36
    %1954 = vmatprep.subr.mxu0 0.0
    %1955 = vmatpush1.msra.mxu0 %v37
    %1956 = vmatprep.subr.mxu0 0.0
    %1957 = vmatpush1.msra.mxu0 0.0
    %1958 = vmatprep.subr.mxu0 0.0
    %1959 = vmatpush1.msra.mxu0 0.0
    %1960 = vmatprep.subr.mxu0 0.0
    %1961 = vmatpush1.msra.mxu0 0.0
    %1962 = vmatprep.subr.mxu0 0.0
    %1963 = vmatpush1.msra.mxu0 0.0
    %1964 = vmatprep.subr.mxu0 0.0
    %1965 = vmatpush1.msra.mxu0 0.0
    %1966 = vmatprep.subr.mxu0 0.0
    %1967 = vmatpush1.msra.mxu0 0.0
    %1968 = vmatprep.subr.mxu0 0.0
    %1969 = vmatpush1.msra.mxu0 0.0
    %1970 = vmatprep.subr.mxu0 0.0
    %1971 = vmatpush1.msra.mxu0 0.0
    %1972 = vmatprep.subr.mxu0 0.0
    %1973 = vmatpush1.msra.mxu0 0.0
    %1974 = vmatprep.subr.mxu0 0.0
    %1975 = vmatpush1.msra.mxu0 0.0
    %1976 = vmatprep.subr.mxu0 0.0
    %1977 = vmatpush1.msra.mxu0 0.0
    %1978 = vmatprep.subr.mxu0 0.0
    %1979 = vmatpush1.msra.mxu0 0.0
    %1980 = vmatprep.subr.mxu0 0.0
    %1981 = vmatpush1.msra.mxu0 0.0
    %1982 = vmatprep.subr.mxu0 0.0
    %1983 = vmatpush1.msra.mxu0 0.0
    %1984 = vmatprep.subr.mxu0 0.0
    %1985 = vmatpush1.msra.mxu0 0.0
    %1986 = vmatprep.subr.mxu0 0.0
    %1987 = vmatpush1.msra.mxu0 0.0
    %1988 = vmatprep.subr.mxu0 0.0
    %1989 = vmatpush1.msra.mxu0 0.0
    %1990 = vmatprep.subr.mxu0 0.0
    %1991 = vmatpush1.msra.mxu0 0.0
    %1992 = vmatprep.subr.mxu0 0.0
    %1993 = vmatpush1.msra.mxu0 0.0
    %1994 = vmatprep.subr.mxu0 0.0
    %1995 = vmatpush1.msra.mxu0 0.0
    %1996 = vmatprep.subr.mxu0 0.0
    %1997 = vmatpush1.msra.mxu0 0.0
    %1998 = vmatprep.subr.mxu0 0.0
    %1999 = vmatpush1.msra.mxu0 0.0
    %2000 = vmatprep.subr.mxu0 0.0
    %2001 = vmatpush1.msra.mxu0 0.0
    %2002 = vmatprep.subr.mxu0 0.0
    %2003 = vmatpush1.msra.mxu0 0.0
    %2004 = vmatprep.subr.mxu0 0.0
    %2005 = vmatpush1.msra.mxu0 0.0
    %2006 = vmatprep.subr.mxu0 0.0
    %2007 = vmatpush1.msra.mxu0 0.0
    %2008 = vmatprep.subr.mxu0 0.0
    %2009 = vmatpush1.msra.mxu0 0.0
    %2010 = vmatprep.subr.mxu0 0.0
    %2011 = vmatpush1.msra.mxu0 0.0
    %2012 = vmatprep.mubr.f32.mxu0 0.0
    %2013 = vmatmul.mubr.f32.gmra.mrb[0].mxu0 %v1946
    %v2014 = vpop.f32.mrb[0].mxu0
    %v2015 = vadd.f32 %v1944, %v2014
    %v2016 = vpop.f32.mrb[0].mxu0
    %2017 = vdwg.mxu0
    %vm2018 = vcmask 64512
    %2019 = vst.msk [vmem:[#allocation2] sm:$0xff] %vm2018, %v2015
    %v2021 = vrot.slane %v1911, 7
    %v2023 = vsel %vm1927, %v1764, %v2021
    %vm2024 = vcmask 254976
    %2025 = vst.msk [vmem:[#allocation4] sm:$0x3] %vm2024, %v2023
    // Predicated region
    $region14: #{tpu_custom_call.1} parent=1 // pred_check
      _
    $region15: #{tpu_custom_call.1} parent=1 // pred_check_branch
      %2027 = sbr.rel (0) target = $region17
    $region16: #{tpu_custom_call.1} parent=1 // pred_region
      %s2029 = ssub.s32 128, 128
      %2030 = vsyncadd [#allocation3], %s2029
      %s2032 = sshll.u32 [#allocation2], 4
      %s2033 = int_to_ptr.vmem [resolvable:$true] %s2032
      %2035 = dma.vmem_to_hbm [thread:$0]  %s2033, 128, %s3, [#allocation3]
    $region17: #{tpu_custom_call.1} parent=1 // pred_fallthru
      _
    // Predicated region
    $region18: #{tpu_custom_call.1} parent=1 // pred_check
      _
    $region19: #{tpu_custom_call.1} parent=1 // pred_check_branch
      %2037 = sbr.rel (0) target = $region21
    $region20: #{tpu_custom_call.1} parent=1 // pred_region
      %s2039 = ssub.s32 32, 32
      %2040 = vsyncadd [#allocation5], %s2039
      %s2042 = sshll.u32 [#allocation4], 4
      %s2043 = int_to_ptr.vmem [resolvable:$true] %s2042
      %2045 = dma.vmem_to_hbm [thread:$0]  %s2043, 32, %s4, [#allocation5]
    $region21: #{tpu_custom_call.1} parent=1 // pred_fallthru
      _
    // Predicated region
    $region22: #{tpu_custom_call.1} parent=1 // pred_check
      _
    $region23: #{tpu_custom_call.1} parent=1 // pred_check_branch
      %2047 = sbr.rel (0) target = $region25
    $region24: #{tpu_custom_call.1} parent=1 // pred_region
      %2048 = dma.done [#allocation3], 128
    $region25: #{tpu_custom_call.1} parent=1 // pred_fallthru
      _
    // Predicated region
    $region26: #{tpu_custom_call.1} parent=1 // pred_check
      _
    $region27: #{tpu_custom_call.1} parent=1 // pred_check_branch
      %2050 = sbr.rel (0) target = $region29
    $region28: #{tpu_custom_call.1} parent=1 // pred_region
      %2051 = dma.done [#allocation5], 32
    $region29: #{tpu_custom_call.1} parent=1 // pred_fallthru
      _
    %2052 = vsyncpa [#allocation3], 1
    %2053 = vsyncpa [#allocation5], 1

</llo_original>
